<compile_context>
chip_gen: v7x
topology: tpu7x:2x2x1
jax: 0.10.0
libtpu: 0.0.40
codegen_flags: <defaults>
</compile_context>

<pallas_src>
import functools
import math

import jax
import jax.numpy as jnp
from jax import lax
from jax.experimental import pallas as pl
from jax.experimental.pallas import tpu as pltpu


def _default_vmem_limit():
    cap = 64 * 1024 * 1024
    try:
        info = pltpu.get_tpu_info()
        cap = int(getattr(info, "vmem_capacity_bytes", cap) or cap)
    except Exception:
        pass
    # ~75% of physical VMEM, never above 100 MiB: ~48 MiB on v7x, ~96 MiB on v5e/v6e.
    return min(int(cap * 3 // 4), 100 * 1024 * 1024)


_VMEM_LIMIT = _default_vmem_limit()


def _mosaic(semantics):
    return pltpu.CompilerParams(dimension_semantics=semantics,
                                vmem_limit_bytes=_VMEM_LIMIT)


def _full_spec(a):
    nd = a.ndim
    return pl.BlockSpec(a.shape, lambda *_: (0,) * nd)


# ----------------------------- Pallas kernels -----------------------------

def _layer_kernel(x_ref, attn_g_ref, ffn_g_ref, wqkv_ref, wo_ref,
                  w1_ref, w3_ref, w2_ref, cos_ref, sin_ref, o_ref,
                  *, n_heads, eps, scale):
    """One full transformer layer for one batch element (block (1, S, D))."""
    x = x_ref[0]                                        # [S, D] f32
    S, D = x.shape
    hd = D // n_heads
    hd2 = hd // 2

    # ---- attention RMSNorm + fused QKV projection ----
    ms = jnp.mean(x * x, axis=-1, keepdims=True)
    xn = x * lax.rsqrt(ms + eps) * attn_g_ref[...]      # [S, D]
    qkv = jnp.dot(xn, wqkv_ref[...], preferred_element_type=jnp.float32)   # [S, 3D]

    cos = cos_ref[...]                                  # [S, hd2]
    sin = sin_ref[...]

    row = lax.broadcasted_iota(jnp.int32, (S, S), 0)
    col = lax.broadcasted_iota(jnp.int32, (S, S), 1)
    causal = col <= row

    def rope(t):                                        # t: [S, hd] in rotate-half layout
        a, b = t[:, :hd2], t[:, hd2:]
        return jnp.concatenate([a * cos - b * sin, a * sin + b * cos], axis=-1)

    # Per-head attention, statically unrolled (H is small); all 2-D ops, lane axis = hd/D.
    outs = []
    for h_i in range(n_heads):
        lo = h_i * hd
        q = rope(qkv[:, lo:lo + hd])                    # [S, hd]
        k = rope(qkv[:, D + lo:D + lo + hd])
        v = qkv[:, 2 * D + lo:2 * D + lo + hd]
        s = lax.dot_general(q, k, (((1,), (1,)), ((), ())),
                            preferred_element_type=jnp.float32) * scale    # [S, S]
        s = jnp.where(causal, s, -jnp.inf)
        m = jnp.max(s, axis=-1, keepdims=True)
        p = jnp.exp(s - m)
        p = p / jnp.sum(p, axis=-1, keepdims=True)      # exact softmax normalization
        outs.append(jnp.dot(p, v, preferred_element_type=jnp.float32))     # [S, hd]
    attn = jnp.concatenate(outs, axis=-1)               # [S, D] lane-dense

    # ---- output projection + residual ----
    h = x + jnp.dot(attn, wo_ref[...], preferred_element_type=jnp.float32)

    # ---- FFN RMSNorm + SwiGLU + residual ----
    ms2 = jnp.mean(h * h, axis=-1, keepdims=True)
    hn = h * lax.rsqrt(ms2 + eps) * ffn_g_ref[...]
    h1 = jnp.dot(hn, w1_ref[...], preferred_element_type=jnp.float32)
    h3 = jnp.dot(hn, w3_ref[...], preferred_element_type=jnp.float32)
    act = (h1 * jax.nn.sigmoid(h1)) * h3                # SiLU(w1 x) * (w3 x)
    o_ref[0] = h + jnp.dot(act, w2_ref[...], preferred_element_type=jnp.float32)


def _final_norm_kernel(x_ref, g_ref, o_ref, *, eps):
    x = x_ref[0]
    ms = jnp.mean(x * x, axis=-1, keepdims=True)
    o_ref[0] = x * lax.rsqrt(ms + eps) * g_ref[...]


# ----------------------------- wrappers -----------------------------

def transformer_layer(h, lp, cos, sin, n_heads, eps):
    B, S, D = h.shape
    scale = 1.0 / math.sqrt(D // n_heads)
    attn_g = lp["attn_norm"].reshape(1, D)
    ffn_g = lp["ffn_norm"].reshape(1, D)
    blk = pl.BlockSpec((1, S, D), lambda b: (b, 0, 0))
    kern = functools.partial(_layer_kernel, n_heads=n_heads, eps=eps, scale=scale)
    return pl.pallas_call(
        kern,
        out_shape=jax.ShapeDtypeStruct((B, S, D), jnp.float32),
        grid=(B,),
        in_specs=[blk, _full_spec(attn_g), _full_spec(ffn_g),
                  _full_spec(lp["wqkv_rope"]), _full_spec(lp["wo"]),
                  _full_spec(lp["w1"]), _full_spec(lp["w3"]), _full_spec(lp["w2"]),
                  _full_spec(cos), _full_spec(sin)],
        out_specs=blk,
        input_output_aliases={0: 0},                    # hidden state is dead after this call
        compiler_params=_mosaic(("parallel",)),
    )(h, attn_g, ffn_g, lp["wqkv_rope"], lp["wo"], lp["w1"], lp["w3"], lp["w2"], cos, sin)


def final_rmsnorm(h, g, eps):
    B, S, D = h.shape
    g2 = g.reshape(1, D)
    blk = pl.BlockSpec((1, S, D), lambda b: (b, 0, 0))
    return pl.pallas_call(
        functools.partial(_final_norm_kernel, eps=eps),
        out_shape=jax.ShapeDtypeStruct((B, S, D), jnp.float32),
        grid=(B,),
        in_specs=[blk, _full_spec(g2)],
        out_specs=blk,
        input_output_aliases={0: 0},
        compiler_params=_mosaic(("parallel",)),
    )(h, g2)


def transformer_forward(tokens, params, n_heads, eps):
    B, S = tokens.shape
    emb = params["tok_emb"]
    h = jnp.take(emb, tokens, axis=0)                   # nn.Embedding lookup (glue); dropout p=0
    cos = params["freq_cos"][:S]                        # [S, hd/2] static tables (precomputed)
    sin = params["freq_sin"][:S]
    for lp in params["layers"]:
        h = transformer_layer(h, lp, cos, sin, n_heads, eps)
    return final_rmsnorm(h, params["norm"], eps)


# ----------------------------- deterministic parameter init -----------------------------

def init_params(key, dim, n_layers, n_heads, vocab, hidden_dim, multiple_of, max_seq_len):
    if hidden_dim is None:
        hd_ = int(2 * (4 * dim) / 3)
        hidden_dim = multiple_of * ((hd_ + multiple_of - 1) // multiple_of)
    head_dim = dim // n_heads
    std = 0.02
    std_scaled = 0.02 / math.sqrt(2 * n_layers)         # w3.weight / wo.weight special init

    # Rotate-half column permutation for wq/wk: per head, even pair-coords first, odd second.
    in_head = jnp.concatenate([jnp.arange(0, head_dim, 2), jnp.arange(1, head_dim, 2)])
    rh_perm = (jnp.arange(n_heads)[:, None] * head_dim + in_head[None, :]).reshape(-1)

    kit = iter(jax.random.split(key, 1 + 7 * n_layers))
    params = {"tok_emb": std * jax.random.normal(next(kit), (vocab, dim), jnp.float32)}
    layers = []
    for _ in range(n_layers):
        wq = std * jax.random.normal(next(kit), (dim, dim), jnp.float32)
        wk = std * jax.random.normal(next(kit), (dim, dim), jnp.float32)
        wv = std * jax.random.normal(next(kit), (dim, dim), jnp.float32)
        wo = std_scaled * jax.random.normal(next(kit), (dim, dim), jnp.float32)
        w1 = std * jax.random.normal(next(kit), (dim, hidden_dim), jnp.float32)
        w3 = std_scaled * jax.random.normal(next(kit), (dim, hidden_dim), jnp.float32)
        w2 = std * jax.random.normal(next(kit), (hidden_dim, dim), jnp.float32)
        layers.append({
            "wqkv": jnp.concatenate([wq, wk, wv], axis=1),                         # reference layout
            "wqkv_rope": jnp.concatenate([wq[:, rh_perm], wk[:, rh_perm], wv], 1),  # kernel layout
            "wo": wo, "w1": w1, "w3": w3, "w2": w2,
            "attn_norm": jnp.ones((dim,), jnp.float32),
            "ffn_norm": jnp.ones((dim,), jnp.float32),
        })
    params["layers"] = layers
    params["norm"] = jnp.ones((dim,), jnp.float32)
    freqs = 1.0 / (10000.0 ** (jnp.arange(0, head_dim, 2, dtype=jnp.float32)[: head_dim // 2] / head_dim))
    t = jnp.arange(max_seq_len, dtype=jnp.float32)
    f = jnp.outer(t, freqs)
    params["freq_cos"] = jnp.cos(f)
    params["freq_sin"] = jnp.sin(f)
    return params


# ----------------------------- pure-JAX reference (mirrors the PyTorch forward) -----------------------------

def ref_forward(tokens, params, n_heads, eps):
    P = lax.Precision.HIGHEST
    B, S = tokens.shape
    emb = params["tok_emb"]
    D = emb.shape[1]
    hd = D // n_heads
    hd2 = hd // 2
    h = jnp.take(emb, tokens, axis=0)
    cos = params["freq_cos"][:S]
    sin = params["freq_sin"][:S]

    def rms(x, w):
        ms = jnp.mean(x * x, axis=-1, keepdims=True)
        return x * lax.rsqrt(ms + eps) * w

    for lp in params["layers"]:
        wq, wk, wv = lp["wqkv"][:, :D], lp["wqkv"][:, D:2 * D], lp["wqkv"][:, 2 * D:]
        xn = rms(h, lp["attn_norm"])
        q = jnp.einsum("bsd,de->bse", xn, wq, precision=P).reshape(B, S, n_heads, hd)
        k = jnp.einsum("bsd,de->bse", xn, wk, precision=P).reshape(B, S, n_heads, hd)
        v = jnp.einsum("bsd,de->bse", xn, wv, precision=P).reshape(B, S, n_heads, hd)
        qp = q.reshape(B, S, n_heads, hd2, 2)
        kp = k.reshape(B, S, n_heads, hd2, 2)
        c = cos[None, :, None, :]
        s = sin[None, :, None, :]
        qr, qi = qp[..., 0], qp[..., 1]
        kr, ki = kp[..., 0], kp[..., 1]
        qrot = jnp.stack([qr * c - qi * s, qr * s + qi * c], axis=-1).reshape(B, S, n_heads, hd)
        krot = jnp.stack([kr * c - ki * s, kr * s + ki * c], axis=-1).reshape(B, S, n_heads, hd)
        qh = jnp.transpose(qrot, (0, 2, 1, 3))
        kh = jnp.transpose(krot, (0, 2, 1, 3))
        vh = jnp.transpose(v, (0, 2, 1, 3))
        scores = jnp.einsum("bhqd,bhkd->bhqk", qh, kh, precision=P) / math.sqrt(hd)
        mask = jnp.where(jnp.triu(jnp.ones((S, S), bool), 1), -jnp.inf, 0.0)
        scores = scores + mask[None, None]
        p = jax.nn.softmax(scores, axis=-1)
        o = jnp.einsum("bhqk,bhkd->bhqd", p, vh, precision=P)
        o = jnp.transpose(o, (0, 2, 1, 3)).reshape(B, S, D)
        h = h + jnp.einsum("bsd,de->bse", o, lp["wo"], precision=P)
        xn = rms(h, lp["ffn_norm"])
        h1 = jnp.einsum("bsd,dh->bsh", xn, lp["w1"], precision=P)
        h3 = jnp.einsum("bsd,dh->bsh", xn, lp["w3"], precision=P)
        h = h + jnp.einsum("bsh,hd->bsd", jax.nn.silu(h1) * h3, lp["w2"], precision=P)
    return rms(h, params["norm"])


# ----------------------------- main -----------------------------

if __name__ == "__main__":
    dim, n_layers, n_heads = 64, 2, 4
    vocab, multiple_of, max_seq_len = 128, 256, 64
    eps = 1e-6
    B, S = 2, 16

    key = jax.random.PRNGKey(0)
    pkey, tkey = jax.random.split(key)
    params = init_params(pkey, dim, n_layers, n_heads, vocab, None, multiple_of, max_seq_len)
    tokens = jax.random.randint(tkey, (B, S), 0, vocab, dtype=jnp.int32)

    fwd = jax.jit(functools.partial(transformer_forward, n_heads=n_heads, eps=eps))
    out = jax.block_until_ready(fwd(tokens, params))

    ref = ref_forward(tokens, params, n_heads, eps)
    assert out.shape == (B, S, dim)
    max_err = float(jnp.max(jnp.abs(out - ref)))
    # Kernel matmuls use TPU default MXU precision vs. the HIGHEST-precision f32 reference.
    assert jnp.allclose(out, ref, atol=1e-2, rtol=1e-2), f"max abs err {max_err}"
    print("KERNEL_OK")
</pallas_src>

<mosaic_0001>
module attributes {stable_mosaic.version = 11 : i64} {
  func.func @_final_norm_kernel(%arg0: i32, %arg1: memref<1x16x64xf32, #tpu.memory_space<vmem>>, %arg2: memref<1x64xf32, #tpu.memory_space<vmem>>, %arg3: memref<1x16x64xf32, #tpu.memory_space<vmem>>) attributes {dimension_semantics = [#tpu.dimension_semantics<parallel>], iteration_bounds = array<i64: 2>, scalar_prefetch = 0 : i64, scratch_operands = 0 : i64, tpu.core_type = #tpu.core_type<tc>, window_params = [{transform_indices = @transform_0, window_bounds = array<i64: 1, 16, 64>}, {pipeline_mode = #tpu.pipeline_mode<synchronous>, transform_indices = @transform_1, window_bounds = array<i64: 1, 64>}, {transform_indices = @transform_2, window_bounds = array<i64: 1, 16, 64>}]} {
    %c0 = arith.constant 0 : index
    %c0_0 = arith.constant 0 : index
    %c0_1 = arith.constant 0 : index
    %0 = vector.load %arg1[%c0, %c0_0, %c0_1] : memref<1x16x64xf32, #tpu.memory_space<vmem>>, vector<1x16x64xf32>
    %1 = vector.shape_cast %0 : vector<1x16x64xf32> to vector<16x64xf32>
    %2 = arith.mulf %1, %1 : vector<16x64xf32>
    %cst = arith.constant dense<0.000000e+00> : vector<16xf32>
    %3 = vector.multi_reduction <add>, %2, %cst [1] : vector<16x64xf32> to vector<16xf32>
    %4 = vector.shape_cast %3 : vector<16xf32> to vector<16x1xf32>
    %cst_2 = arith.constant 6.400000e+01 : f32
    %5 = vector.broadcast %cst_2 : f32 to vector<16x1xf32>
    %6 = arith.divf %4, %5 : vector<16x1xf32>
    %cst_3 = arith.constant 9.99999997E-7 : f32
    %7 = vector.broadcast %cst_3 : f32 to vector<16x1xf32>
    %8 = arith.addf %6, %7 : vector<16x1xf32>
    %9 = math.rsqrt %8 : vector<16x1xf32>
    %10 = vector.broadcast %9 : vector<16x1xf32> to vector<16x64xf32>
    %11 = arith.mulf %1, %10 : vector<16x64xf32>
    %c0_4 = arith.constant 0 : index
    %c0_5 = arith.constant 0 : index
    %12 = vector.load %arg2[%c0_4, %c0_5] : memref<1x64xf32, #tpu.memory_space<vmem>>, vector<1x64xf32>
    %13 = vector.broadcast %12 : vector<1x64xf32> to vector<16x64xf32>
    %14 = arith.mulf %11, %13 : vector<16x64xf32>
    %c0_6 = arith.constant 0 : index
    %c0_7 = arith.constant 0 : index
    %c0_8 = arith.constant 0 : index
    %15 = vector.load %arg3[%c0_6, %c0_7, %c0_8] : memref<1x16x64xf32, #tpu.memory_space<vmem>>, vector<1x16x64xf32>
    %16 = vector.shape_cast %15 : vector<1x16x64xf32> to vector<16x64xf32>
    %17 = vector.shape_cast %14 : vector<16x64xf32> to vector<1x16x64xf32>
    tpu.vector_store %arg3[%c0_6, %c0_7, %c0_8], %17 {strides = array<i32>} : memref<1x16x64xf32, #tpu.memory_space<vmem>>, vector<1x16x64xf32>,
    return
  }
  func.func @transform_0(%arg0: i32) -> (i32, i32, i32) {
    %c0_i32 = arith.constant 0 : i32
    %c0_i32_0 = arith.constant 0 : i32
    %c0_i32_1 = arith.constant 0 : i32
    return %arg0, %c0_i32, %c0_i32_0 : i32, i32, i32
  }
  func.func @transform_1(%arg0: i32) -> (i32, i32) {
    %c0_i32 = arith.constant 0 : i32
    %c0_i32_0 = arith.constant 0 : i32
    %c0_i32_1 = arith.constant 0 : i32
    return %c0_i32, %c0_i32_0 : i32, i32
  }
  func.func @transform_2(%arg0: i32) -> (i32, i32, i32) {
    %c0_i32 = arith.constant 0 : i32
    %c0_i32_0 = arith.constant 0 : i32
    %c0_i32_1 = arith.constant 0 : i32
    return %arg0, %c0_i32, %c0_i32_0 : i32, i32, i32
  }
}

module attributes {stable_mosaic.version = 11 : i64} {
  func.func @_layer_kernel(%arg0: i32, %arg1: memref<1x16x64xf32, #tpu.memory_space<vmem>>, %arg2: memref<1x64xf32, #tpu.memory_space<vmem>>, %arg3: memref<1x64xf32, #tpu.memory_space<vmem>>, %arg4: memref<64x192xf32, #tpu.memory_space<vmem>>, %arg5: memref<64x64xf32, #tpu.memory_space<vmem>>, %arg6: memref<64x256xf32, #tpu.memory_space<vmem>>, %arg7: memref<64x256xf32, #tpu.memory_space<vmem>>, %arg8: memref<256x64xf32, #tpu.memory_space<vmem>>, %arg9: memref<16x8xf32, #tpu.memory_space<vmem>>, %arg10: memref<16x8xf32, #tpu.memory_space<vmem>>, %arg11: memref<1x16x64xf32, #tpu.memory_space<vmem>>) attributes {dimension_semantics = [#tpu.dimension_semantics<parallel>], iteration_bounds = array<i64: 2>, scalar_prefetch = 0 : i64, scratch_operands = 0 : i64, tpu.core_type = #tpu.core_type<tc>, window_params = [{transform_indices = @transform_0, window_bounds = array<i64: 1, 16, 64>}, {pipeline_mode = #tpu.pipeline_mode<synchronous>, transform_indices = @transform_1, window_bounds = array<i64: 1, 64>}, {pipeline_mode = #tpu.pipeline_mode<synchronous>, transform_indices = @transform_2, window_bounds = array<i64: 1, 64>}, {pipeline_mode = #tpu.pipeline_mode<synchronous>, transform_indices = @transform_3, window_bounds = array<i64: 64, 192>}, {pipeline_mode = #tpu.pipeline_mode<synchronous>, transform_indices = @transform_4, window_bounds = array<i64: 64, 64>}, {pipeline_mode = #tpu.pipeline_mode<synchronous>, transform_indices = @transform_5, window_bounds = array<i64: 64, 256>}, {pipeline_mode = #tpu.pipeline_mode<synchronous>, transform_indices = @transform_6, window_bounds = array<i64: 64, 256>}, {pipeline_mode = #tpu.pipeline_mode<synchronous>, transform_indices = @transform_7, window_bounds = array<i64: 256, 64>}, {pipeline_mode = #tpu.pipeline_mode<synchronous>, transform_indices = @transform_8, window_bounds = array<i64: 16, 8>}, {pipeline_mode = #tpu.pipeline_mode<synchronous>, transform_indices = @transform_9, window_bounds = array<i64: 16, 8>}, {transform_indices = @transform_10, window_bounds = array<i64: 1, 16, 64>}]} {
    %c0 = arith.constant 0 : index
    %c0_0 = arith.constant 0 : index
    %c0_1 = arith.constant 0 : index
    %0 = vector.load %arg1[%c0, %c0_0, %c0_1] : memref<1x16x64xf32, #tpu.memory_space<vmem>>, vector<1x16x64xf32>
    %1 = vector.shape_cast %0 : vector<1x16x64xf32> to vector<16x64xf32>
    %2 = arith.mulf %1, %1 : vector<16x64xf32>
    %cst = arith.constant dense<0.000000e+00> : vector<16xf32>
    %3 = vector.multi_reduction <add>, %2, %cst [1] : vector<16x64xf32> to vector<16xf32>
    %4 = vector.shape_cast %3 : vector<16xf32> to vector<16x1xf32>
    %cst_2 = arith.constant 6.400000e+01 : f32
    %5 = vector.broadcast %cst_2 : f32 to vector<16x1xf32>
    %6 = arith.divf %4, %5 : vector<16x1xf32>
    %cst_3 = arith.constant 9.99999997E-7 : f32
    %7 = vector.broadcast %cst_3 : f32 to vector<16x1xf32>
    %8 = arith.addf %6, %7 : vector<16x1xf32>
    %9 = math.rsqrt %8 : vector<16x1xf32>
    %10 = vector.broadcast %9 : vector<16x1xf32> to vector<16x64xf32>
    %11 = arith.mulf %1, %10 : vector<16x64xf32>
    %c0_4 = arith.constant 0 : index
    %c0_5 = arith.constant 0 : index
    %12 = vector.load %arg2[%c0_4, %c0_5] : memref<1x64xf32, #tpu.memory_space<vmem>>, vector<1x64xf32>
    %13 = vector.broadcast %12 : vector<1x64xf32> to vector<16x64xf32>
    %14 = arith.mulf %11, %13 : vector<16x64xf32>
    %c0_6 = arith.constant 0 : index
    %c0_7 = arith.constant 0 : index
    %15 = vector.load %arg4[%c0_6, %c0_7] : memref<64x192xf32, #tpu.memory_space<vmem>>, vector<64x192xf32>
    %cst_8 = arith.constant dense<0.000000e+00> : vector<16x192xf32>
    %16 = tpu.matmul %14, %15, %cst_8 {dimension_numbers = #tpu.dot_dimension_numbers<[1], [0], [0], [1], [0, 0, 1, 1], [], []>} : vector<16x64xf32>, vector<64x192xf32>, vector<16x192xf32> -> vector<16x192xf32>
    %c0_9 = arith.constant 0 : index
    %c0_10 = arith.constant 0 : index
    %17 = vector.load %arg9[%c0_9, %c0_10] : memref<16x8xf32, #tpu.memory_space<vmem>>, vector<16x8xf32>
    %c0_11 = arith.constant 0 : index
    %c0_12 = arith.constant 0 : index
    %18 = vector.load %arg10[%c0_11, %c0_12] : memref<16x8xf32, #tpu.memory_space<vmem>>, vector<16x8xf32>
    %19 = tpu.iota {dimensions = array<i32: 0>} : vector<16x16xi32>
    %20 = tpu.iota {dimensions = array<i32: 1>} : vector<16x16xi32>
    %21 = arith.cmpi sle, %20, %19 : vector<16x16xi32>
    %22 = vector.extract_strided_slice %16 {offsets = [0, 0], sizes = [16, 16], strides = [1, 1]} : vector<16x192xf32> to vector<16x16xf32>
    %23 = vector.extract_strided_slice %22 {offsets = [0, 0], sizes = [16, 8], strides = [1, 1]} : vector<16x16xf32> to vector<16x8xf32>
    %24 = vector.extract_strided_slice %22 {offsets = [0, 8], sizes = [16, 8], strides = [1, 1]} : vector<16x16xf32> to vector<16x8xf32>
    %25 = arith.mulf %23, %17 : vector<16x8xf32>
    %26 = arith.mulf %24, %18 : vector<16x8xf32>
    %27 = arith.subf %25, %26 : vector<16x8xf32>
    %28 = arith.mulf %23, %18 : vector<16x8xf32>
    %29 = arith.mulf %24, %17 : vector<16x8xf32>
    %30 = arith.addf %28, %29 : vector<16x8xf32>
    %31 = tpu.concatenate %27, %30 in 1 : vector<16x8xf32>, vector<16x8xf32> -> vector<16x16xf32>
    %32 = vector.extract_strided_slice %16 {offsets = [0, 64], sizes = [16, 16], strides = [1, 1]} : vector<16x192xf32> to vector<16x16xf32>
    %33 = vector.extract_strided_slice %32 {offsets = [0, 0], sizes = [16, 8], strides = [1, 1]} : vector<16x16xf32> to vector<16x8xf32>
    %34 = vector.extract_strided_slice %32 {offsets = [0, 8], sizes = [16, 8], strides = [1, 1]} : vector<16x16xf32> to vector<16x8xf32>
    %35 = arith.mulf %33, %17 : vector<16x8xf32>
    %36 = arith.mulf %34, %18 : vector<16x8xf32>
    %37 = arith.subf %35, %36 : vector<16x8xf32>
    %38 = arith.mulf %33, %18 : vector<16x8xf32>
    %39 = arith.mulf %34, %17 : vector<16x8xf32>
    %40 = arith.addf %38, %39 : vector<16x8xf32>
    %41 = tpu.concatenate %37, %40 in 1 : vector<16x8xf32>, vector<16x8xf32> -> vector<16x16xf32>
    %42 = vector.extract_strided_slice %16 {offsets = [0, 128], sizes = [16, 16], strides = [1, 1]} : vector<16x192xf32> to vector<16x16xf32>
    %cst_13 = arith.constant dense<0.000000e+00> : vector<16x16xf32>
    %43 = tpu.matmul %31, %41, %cst_13 {dimension_numbers = #tpu.dot_dimension_numbers<[1], [1], [0], [0], [0, 0, 1, 0], [], []>} : vector<16x16xf32>, vector<16x16xf32>, vector<16x16xf32> -> vector<16x16xf32>
    %cst_14 = arith.constant 2.500000e-01 : f32
    %44 = vector.broadcast %cst_14 : f32 to vector<16x16xf32>
    %45 = arith.mulf %43, %44 : vector<16x16xf32>
    %cst_15 = arith.constant 0xFF800000 : f32
    %46 = vector.broadcast %cst_15 : f32 to vector<16x16xf32>
    %47 = arith.select %21, %45, %46 : vector<16x16xi1>, vector<16x16xf32>
    %cst_16 = arith.constant dense<0xFF800000> : vector<16xf32>
    %48 = vector.multi_reduction <maximumf>, %47, %cst_16 [1] : vector<16x16xf32> to vector<16xf32>
    %49 = vector.shape_cast %48 : vector<16xf32> to vector<16x1xf32>
    %50 = vector.broadcast %49 : vector<16x1xf32> to vector<16x16xf32>
    %51 = arith.subf %47, %50 : vector<16x16xf32>
    %52 = math.exp %51 : vector<16x16xf32>
    %cst_17 = arith.constant dense<0.000000e+00> : vector<16xf32>
    %53 = vector.multi_reduction <add>, %52, %cst_17 [1] : vector<16x16xf32> to vector<16xf32>
    %54 = vector.shape_cast %53 : vector<16xf32> to vector<16x1xf32>
    %55 = vector.broadcast %54 : vector<16x1xf32> to vector<16x16xf32>
    %56 = arith.divf %52, %55 : vector<16x16xf32>
    %cst_18 = arith.constant dense<0.000000e+00> : vector<16x16xf32>
    %57 = tpu.matmul %56, %42, %cst_18 {dimension_numbers = #tpu.dot_dimension_numbers<[1], [0], [0], [1], [0, 0, 1, 1], [], []>} : vector<16x16xf32>, vector<16x16xf32>, vector<16x16xf32> -> vector<16x16xf32>
    %58 = vector.extract_strided_slice %16 {offsets = [0, 16], sizes = [16, 16], strides = [1, 1]} : vector<16x192xf32> to vector<16x16xf32>
    %59 = vector.extract_strided_slice %58 {offsets = [0, 0], sizes = [16, 8], strides = [1, 1]} : vector<16x16xf32> to vector<16x8xf32>
    %60 = vector.extract_strided_slice %58 {offsets = [0, 8], sizes = [16, 8], strides = [1, 1]} : vector<16x16xf32> to vector<16x8xf32>
    %61 = arith.mulf %59, %17 : vector<16x8xf32>
    %62 = arith.mulf %60, %18 : vector<16x8xf32>
    %63 = arith.subf %61, %62 : vector<16x8xf32>
    %64 = arith.mulf %59, %18 : vector<16x8xf32>
    %65 = arith.mulf %60, %17 : vector<16x8xf32>
    %66 = arith.addf %64, %65 : vector<16x8xf32>
    %67 = tpu.concatenate %63, %66 in 1 : vector<16x8xf32>, vector<16x8xf32> -> vector<16x16xf32>
    %68 = vector.extract_strided_slice %16 {offsets = [0, 80], sizes = [16, 16], strides = [1, 1]} : vector<16x192xf32> to vector<16x16xf32>
    %69 = vector.extract_strided_slice %68 {offsets = [0, 0], sizes = [16, 8], strides = [1, 1]} : vector<16x16xf32> to vector<16x8xf32>
    %70 = vector.extract_strided_slice %68 {offsets = [0, 8], sizes = [16, 8], strides = [1, 1]} : vector<16x16xf32> to vector<16x8xf32>
    %71 = arith.mulf %69, %17 : vector<16x8xf32>
    %72 = arith.mulf %70, %18 : vector<16x8xf32>
    %73 = arith.subf %71, %72 : vector<16x8xf32>
    %74 = arith.mulf %69, %18 : vector<16x8xf32>
    %75 = arith.mulf %70, %17 : vector<16x8xf32>
    %76 = arith.addf %74, %75 : vector<16x8xf32>
    %77 = tpu.concatenate %73, %76 in 1 : vector<16x8xf32>, vector<16x8xf32> -> vector<16x16xf32>
    %78 = vector.extract_strided_slice %16 {offsets = [0, 144], sizes = [16, 16], strides = [1, 1]} : vector<16x192xf32> to vector<16x16xf32>
    %cst_19 = arith.constant dense<0.000000e+00> : vector<16x16xf32>
    %79 = tpu.matmul %67, %77, %cst_19 {dimension_numbers = #tpu.dot_dimension_numbers<[1], [1], [0], [0], [0, 0, 1, 0], [], []>} : vector<16x16xf32>, vector<16x16xf32>, vector<16x16xf32> -> vector<16x16xf32>
    %cst_20 = arith.constant 2.500000e-01 : f32
    %80 = vector.broadcast %cst_20 : f32 to vector<16x16xf32>
    %81 = arith.mulf %79, %80 : vector<16x16xf32>
    %cst_21 = arith.constant 0xFF800000 : f32
    %82 = vector.broadcast %cst_21 : f32 to vector<16x16xf32>
    %83 = arith.select %21, %81, %82 : vector<16x16xi1>, vector<16x16xf32>
    %cst_22 = arith.constant dense<0xFF800000> : vector<16xf32>
    %84 = vector.multi_reduction <maximumf>, %83, %cst_22 [1] : vector<16x16xf32> to vector<16xf32>
    %85 = vector.shape_cast %84 : vector<16xf32> to vector<16x1xf32>
    %86 = vector.broadcast %85 : vector<16x1xf32> to vector<16x16xf32>
    %87 = arith.subf %83, %86 : vector<16x16xf32>
    %88 = math.exp %87 : vector<16x16xf32>
    %cst_23 = arith.constant dense<0.000000e+00> : vector<16xf32>
    %89 = vector.multi_reduction <add>, %88, %cst_23 [1] : vector<16x16xf32> to vector<16xf32>
    %90 = vector.shape_cast %89 : vector<16xf32> to vector<16x1xf32>
    %91 = vector.broadcast %90 : vector<16x1xf32> to vector<16x16xf32>
    %92 = arith.divf %88, %91 : vector<16x16xf32>
    %cst_24 = arith.constant dense<0.000000e+00> : vector<16x16xf32>
    %93 = tpu.matmul %92, %78, %cst_24 {dimension_numbers = #tpu.dot_dimension_numbers<[1], [0], [0], [1], [0, 0, 1, 1], [], []>} : vector<16x16xf32>, vector<16x16xf32>, vector<16x16xf32> -> vector<16x16xf32>
    %94 = vector.extract_strided_slice %16 {offsets = [0, 32], sizes = [16, 16], strides = [1, 1]} : vector<16x192xf32> to vector<16x16xf32>
    %95 = vector.extract_strided_slice %94 {offsets = [0, 0], sizes = [16, 8], strides = [1, 1]} : vector<16x16xf32> to vector<16x8xf32>
    %96 = vector.extract_strided_slice %94 {offsets = [0, 8], sizes = [16, 8], strides = [1, 1]} : vector<16x16xf32> to vector<16x8xf32>
    %97 = arith.mulf %95, %17 : vector<16x8xf32>
    %98 = arith.mulf %96, %18 : vector<16x8xf32>
    %99 = arith.subf %97, %98 : vector<16x8xf32>
    %100 = arith.mulf %95, %18 : vector<16x8xf32>
    %101 = arith.mulf %96, %17 : vector<16x8xf32>
    %102 = arith.addf %100, %101 : vector<16x8xf32>
    %103 = tpu.concatenate %99, %102 in 1 : vector<16x8xf32>, vector<16x8xf32> -> vector<16x16xf32>
    %104 = vector.extract_strided_slice %16 {offsets = [0, 96], sizes = [16, 16], strides = [1, 1]} : vector<16x192xf32> to vector<16x16xf32>
    %105 = vector.extract_strided_slice %104 {offsets = [0, 0], sizes = [16, 8], strides = [1, 1]} : vector<16x16xf32> to vector<16x8xf32>
    %106 = vector.extract_strided_slice %104 {offsets = [0, 8], sizes = [16, 8], strides = [1, 1]} : vector<16x16xf32> to vector<16x8xf32>
    %107 = arith.mulf %105, %17 : vector<16x8xf32>
    %108 = arith.mulf %106, %18 : vector<16x8xf32>
    %109 = arith.subf %107, %108 : vector<16x8xf32>
    %110 = arith.mulf %105, %18 : vector<16x8xf32>
    %111 = arith.mulf %106, %17 : vector<16x8xf32>
    %112 = arith.addf %110, %111 : vector<16x8xf32>
    %113 = tpu.concatenate %109, %112 in 1 : vector<16x8xf32>, vector<16x8xf32> -> vector<16x16xf32>
    %114 = vector.extract_strided_slice %16 {offsets = [0, 160], sizes = [16, 16], strides = [1, 1]} : vector<16x192xf32> to vector<16x16xf32>
    %cst_25 = arith.constant dense<0.000000e+00> : vector<16x16xf32>
    %115 = tpu.matmul %103, %113, %cst_25 {dimension_numbers = #tpu.dot_dimension_numbers<[1], [1], [0], [0], [0, 0, 1, 0], [], []>} : vector<16x16xf32>, vector<16x16xf32>, vector<16x16xf32> -> vector<16x16xf32>
    %cst_26 = arith.constant 2.500000e-01 : f32
    %116 = vector.broadcast %cst_26 : f32 to vector<16x16xf32>
    %117 = arith.mulf %115, %116 : vector<16x16xf32>
    %cst_27 = arith.constant 0xFF800000 : f32
    %118 = vector.broadcast %cst_27 : f32 to vector<16x16xf32>
    %119 = arith.select %21, %117, %118 : vector<16x16xi1>, vector<16x16xf32>
    %cst_28 = arith.constant dense<0xFF800000> : vector<16xf32>
    %120 = vector.multi_reduction <maximumf>, %119, %cst_28 [1] : vector<16x16xf32> to vector<16xf32>
    %121 = vector.shape_cast %120 : vector<16xf32> to vector<16x1xf32>
    %122 = vector.broadcast %121 : vector<16x1xf32> to vector<16x16xf32>
    %123 = arith.subf %119, %122 : vector<16x16xf32>
    %124 = math.exp %123 : vector<16x16xf32>
    %cst_29 = arith.constant dense<0.000000e+00> : vector<16xf32>
    %125 = vector.multi_reduction <add>, %124, %cst_29 [1] : vector<16x16xf32> to vector<16xf32>
    %126 = vector.shape_cast %125 : vector<16xf32> to vector<16x1xf32>
    %127 = vector.broadcast %126 : vector<16x1xf32> to vector<16x16xf32>
    %128 = arith.divf %124, %127 : vector<16x16xf32>
    %cst_30 = arith.constant dense<0.000000e+00> : vector<16x16xf32>
    %129 = tpu.matmul %128, %114, %cst_30 {dimension_numbers = #tpu.dot_dimension_numbers<[1], [0], [0], [1], [0, 0, 1, 1], [], []>} : vector<16x16xf32>, vector<16x16xf32>, vector<16x16xf32> -> vector<16x16xf32>
    %130 = vector.extract_strided_slice %16 {offsets = [0, 48], sizes = [16, 16], strides = [1, 1]} : vector<16x192xf32> to vector<16x16xf32>
    %131 = vector.extract_strided_slice %130 {offsets = [0, 0], sizes = [16, 8], strides = [1, 1]} : vector<16x16xf32> to vector<16x8xf32>
    %132 = vector.extract_strided_slice %130 {offsets = [0, 8], sizes = [16, 8], strides = [1, 1]} : vector<16x16xf32> to vector<16x8xf32>
    %133 = arith.mulf %131, %17 : vector<16x8xf32>
    %134 = arith.mulf %132, %18 : vector<16x8xf32>
    %135 = arith.subf %133, %134 : vector<16x8xf32>
    %136 = arith.mulf %131, %18 : vector<16x8xf32>
    %137 = arith.mulf %132, %17 : vector<16x8xf32>
    %138 = arith.addf %136, %137 : vector<16x8xf32>
    %139 = tpu.concatenate %135, %138 in 1 : vector<16x8xf32>, vector<16x8xf32> -> vector<16x16xf32>
    %140 = vector.extract_strided_slice %16 {offsets = [0, 112], sizes = [16, 16], strides = [1, 1]} : vector<16x192xf32> to vector<16x16xf32>
    %141 = vector.extract_strided_slice %140 {offsets = [0, 0], sizes = [16, 8], strides = [1, 1]} : vector<16x16xf32> to vector<16x8xf32>
    %142 = vector.extract_strided_slice %140 {offsets = [0, 8], sizes = [16, 8], strides = [1, 1]} : vector<16x16xf32> to vector<16x8xf32>
    %143 = arith.mulf %141, %17 : vector<16x8xf32>
    %144 = arith.mulf %142, %18 : vector<16x8xf32>
    %145 = arith.subf %143, %144 : vector<16x8xf32>
    %146 = arith.mulf %141, %18 : vector<16x8xf32>
    %147 = arith.mulf %142, %17 : vector<16x8xf32>
    %148 = arith.addf %146, %147 : vector<16x8xf32>
    %149 = tpu.concatenate %145, %148 in 1 : vector<16x8xf32>, vector<16x8xf32> -> vector<16x16xf32>
    %150 = vector.extract_strided_slice %16 {offsets = [0, 176], sizes = [16, 16], strides = [1, 1]} : vector<16x192xf32> to vector<16x16xf32>
    %cst_31 = arith.constant dense<0.000000e+00> : vector<16x16xf32>
    %151 = tpu.matmul %139, %149, %cst_31 {dimension_numbers = #tpu.dot_dimension_numbers<[1], [1], [0], [0], [0, 0, 1, 0], [], []>} : vector<16x16xf32>, vector<16x16xf32>, vector<16x16xf32> -> vector<16x16xf32>
    %cst_32 = arith.constant 2.500000e-01 : f32
    %152 = vector.broadcast %cst_32 : f32 to vector<16x16xf32>
    %153 = arith.mulf %151, %152 : vector<16x16xf32>
    %cst_33 = arith.constant 0xFF800000 : f32
    %154 = vector.broadcast %cst_33 : f32 to vector<16x16xf32>
    %155 = arith.select %21, %153, %154 : vector<16x16xi1>, vector<16x16xf32>
    %cst_34 = arith.constant dense<0xFF800000> : vector<16xf32>
    %156 = vector.multi_reduction <maximumf>, %155, %cst_34 [1] : vector<16x16xf32> to vector<16xf32>
    %157 = vector.shape_cast %156 : vector<16xf32> to vector<16x1xf32>
    %158 = vector.broadcast %157 : vector<16x1xf32> to vector<16x16xf32>
    %159 = arith.subf %155, %158 : vector<16x16xf32>
    %160 = math.exp %159 : vector<16x16xf32>
    %cst_35 = arith.constant dense<0.000000e+00> : vector<16xf32>
    %161 = vector.multi_reduction <add>, %160, %cst_35 [1] : vector<16x16xf32> to vector<16xf32>
    %162 = vector.shape_cast %161 : vector<16xf32> to vector<16x1xf32>
    %163 = vector.broadcast %162 : vector<16x1xf32> to vector<16x16xf32>
    %164 = arith.divf %160, %163 : vector<16x16xf32>
    %cst_36 = arith.constant dense<0.000000e+00> : vector<16x16xf32>
    %165 = tpu.matmul %164, %150, %cst_36 {dimension_numbers = #tpu.dot_dimension_numbers<[1], [0], [0], [1], [0, 0, 1, 1], [], []>} : vector<16x16xf32>, vector<16x16xf32>, vector<16x16xf32> -> vector<16x16xf32>
    %166 = tpu.concatenate %57, %93, %129, %165 in 1 : vector<16x16xf32>, vector<16x16xf32>, vector<16x16xf32>, vector<16x16xf32> -> vector<16x64xf32>
    %c0_37 = arith.constant 0 : index
    %c0_38 = arith.constant 0 : index
    %167 = vector.load %arg5[%c0_37, %c0_38] : memref<64x64xf32, #tpu.memory_space<vmem>>, vector<64x64xf32>
    %cst_39 = arith.constant dense<0.000000e+00> : vector<16x64xf32>
    %168 = tpu.matmul %166, %167, %cst_39 {dimension_numbers = #tpu.dot_dimension_numbers<[1], [0], [0], [1], [0, 0, 1, 1], [], []>} : vector<16x64xf32>, vector<64x64xf32>, vector<16x64xf32> -> vector<16x64xf32>
    %169 = arith.addf %1, %168 : vector<16x64xf32>
    %170 = arith.mulf %169, %169 : vector<16x64xf32>
    %cst_40 = arith.constant dense<0.000000e+00> : vector<16xf32>
    %171 = vector.multi_reduction <add>, %170, %cst_40 [1] : vector<16x64xf32> to vector<16xf32>
    %172 = vector.shape_cast %171 : vector<16xf32> to vector<16x1xf32>
    %cst_41 = arith.constant 6.400000e+01 : f32
    %173 = vector.broadcast %cst_41 : f32 to vector<16x1xf32>
    %174 = arith.divf %172, %173 : vector<16x1xf32>
    %cst_42 = arith.constant 9.99999997E-7 : f32
    %175 = vector.broadcast %cst_42 : f32 to vector<16x1xf32>
    %176 = arith.addf %174, %175 : vector<16x1xf32>
    %177 = math.rsqrt %176 : vector<16x1xf32>
    %178 = vector.broadcast %177 : vector<16x1xf32> to vector<16x64xf32>
    %179 = arith.mulf %169, %178 : vector<16x64xf32>
    %c0_43 = arith.constant 0 : index
    %c0_44 = arith.constant 0 : index
    %180 = vector.load %arg3[%c0_43, %c0_44] : memref<1x64xf32, #tpu.memory_space<vmem>>, vector<1x64xf32>
    %181 = vector.broadcast %180 : vector<1x64xf32> to vector<16x64xf32>
    %182 = arith.mulf %179, %181 : vector<16x64xf32>
    %c0_45 = arith.constant 0 : index
    %c0_46 = arith.constant 0 : index
    %183 = vector.load %arg6[%c0_45, %c0_46] : memref<64x256xf32, #tpu.memory_space<vmem>>, vector<64x256xf32>
    %cst_47 = arith.constant dense<0.000000e+00> : vector<16x256xf32>
    %184 = tpu.matmul %182, %183, %cst_47 {dimension_numbers = #tpu.dot_dimension_numbers<[1], [0], [0], [1], [0, 0, 1, 1], [], []>} : vector<16x64xf32>, vector<64x256xf32>, vector<16x256xf32> -> vector<16x256xf32>
    %c0_48 = arith.constant 0 : index
    %c0_49 = arith.constant 0 : index
    %185 = vector.load %arg7[%c0_48, %c0_49] : memref<64x256xf32, #tpu.memory_space<vmem>>, vector<64x256xf32>
    %cst_50 = arith.constant dense<0.000000e+00> : vector<16x256xf32>
    %186 = tpu.matmul %182, %185, %cst_50 {dimension_numbers = #tpu.dot_dimension_numbers<[1], [0], [0], [1], [0, 0, 1, 1], [], []>} : vector<16x64xf32>, vector<64x256xf32>, vector<16x256xf32> -> vector<16x256xf32>
    %187 = arith.negf %184 : vector<16x256xf32>
    %188 = math.exp %187 : vector<16x256xf32>
    %cst_51 = arith.constant 1.000000e+00 : f32
    %189 = vector.broadcast %cst_51 : f32 to vector<16x256xf32>
    %190 = arith.addf %189, %188 : vector<16x256xf32>
    %191 = arith.divf %189, %190 : vector<16x256xf32>
    %192 = arith.mulf %184, %191 : vector<16x256xf32>
    %193 = arith.mulf %192, %186 : vector<16x256xf32>
    %c0_52 = arith.constant 0 : index
    %c0_53 = arith.constant 0 : index
    %194 = vector.load %arg8[%c0_52, %c0_53] : memref<256x64xf32, #tpu.memory_space<vmem>>, vector<256x64xf32>
    %cst_54 = arith.constant dense<0.000000e+00> : vector<16x64xf32>
    %195 = tpu.matmul %193, %194, %cst_54 {dimension_numbers = #tpu.dot_dimension_numbers<[1], [0], [0], [1], [0, 0, 1, 1], [], []>} : vector<16x256xf32>, vector<256x64xf32>, vector<16x64xf32> -> vector<16x64xf32>
    %196 = arith.addf %169, %195 : vector<16x64xf32>
    %c0_55 = arith.constant 0 : index
    %c0_56 = arith.constant 0 : index
    %c0_57 = arith.constant 0 : index
    %197 = vector.load %arg11[%c0_55, %c0_56, %c0_57] : memref<1x16x64xf32, #tpu.memory_space<vmem>>, vector<1x16x64xf32>
    %198 = vector.shape_cast %197 : vector<1x16x64xf32> to vector<16x64xf32>
    %199 = vector.shape_cast %196 : vector<16x64xf32> to vector<1x16x64xf32>
    tpu.vector_store %arg11[%c0_55, %c0_56, %c0_57], %199 {strides = array<i32>} : memref<1x16x64xf32, #tpu.memory_space<vmem>>, vector<1x16x64xf32>,
    return
  }
  func.func @transform_0(%arg0: i32) -> (i32, i32, i32) {
    %c0_i32 = arith.constant 0 : i32
    %c0_i32_0 = arith.constant 0 : i32
    %c0_i32_1 = arith.constant 0 : i32
    return %arg0, %c0_i32, %c0_i32_0 : i32, i32, i32
  }
  func.func @transform_1(%arg0: i32) -> (i32, i32) {
    %c0_i32 = arith.constant 0 : i32
    %c0_i32_0 = arith.constant 0 : i32
    %c0_i32_1 = arith.constant 0 : i32
    return %c0_i32, %c0_i32_0 : i32, i32
  }
  func.func @transform_2(%arg0: i32) -> (i32, i32) {
    %c0_i32 = arith.constant 0 : i32
    %c0_i32_0 = arith.constant 0 : i32
    %c0_i32_1 = arith.constant 0 : i32
    return %c0_i32, %c0_i32_0 : i32, i32
  }
  func.func @transform_3(%arg0: i32) -> (i32, i32) {
    %c0_i32 = arith.constant 0 : i32
    %c0_i32_0 = arith.constant 0 : i32
    %c0_i32_1 = arith.constant 0 : i32
    return %c0_i32, %c0_i32_0 : i32, i32
  }
  func.func @transform_4(%arg0: i32) -> (i32, i32) {
    %c0_i32 = arith.constant 0 : i32
    %c0_i32_0 = arith.constant 0 : i32
    %c0_i32_1 = arith.constant 0 : i32
    return %c0_i32, %c0_i32_0 : i32, i32
  }
  func.func @transform_5(%arg0: i32) -> (i32, i32) {
    %c0_i32 = arith.constant 0 : i32
    %c0_i32_0 = arith.constant 0 : i32
    %c0_i32_1 = arith.constant 0 : i32
    return %c0_i32, %c0_i32_0 : i32, i32
  }
  func.func @transform_6(%arg0: i32) -> (i32, i32) {
    %c0_i32 = arith.constant 0 : i32
    %c0_i32_0 = arith.constant 0 : i32
    %c0_i32_1 = arith.constant 0 : i32
    return %c0_i32, %c0_i32_0 : i32, i32
  }
  func.func @transform_7(%arg0: i32) -> (i32, i32) {
    %c0_i32 = arith.constant 0 : i32
    %c0_i32_0 = arith.constant 0 : i32
    %c0_i32_1 = arith.constant 0 : i32
    return %c0_i32, %c0_i32_0 : i32, i32
  }
  func.func @transform_8(%arg0: i32) -> (i32, i32) {
    %c0_i32 = arith.constant 0 : i32
    %c0_i32_0 = arith.constant 0 : i32
    %c0_i32_1 = arith.constant 0 : i32
    return %c0_i32, %c0_i32_0 : i32, i32
  }
  func.func @transform_9(%arg0: i32) -> (i32, i32) {
    %c0_i32 = arith.constant 0 : i32
    %c0_i32_0 = arith.constant 0 : i32
    %c0_i32_1 = arith.constant 0 : i32
    return %c0_i32, %c0_i32_0 : i32, i32
  }
  func.func @transform_10(%arg0: i32) -> (i32, i32, i32) {
    %c0_i32 = arith.constant 0 : i32
    %c0_i32_0 = arith.constant 0 : i32
    %c0_i32_1 = arith.constant 0 : i32
    return %arg0, %c0_i32, %c0_i32_0 : i32, i32, i32
  }
}

</mosaic_0001>

<llo_original>
// kernel: transformer_forward.5
$region0: #{transformer_forward.5}
  #allocation0 [shape = 'u32[]', space=smem, size = 0x4, offset = 0x4, fixed_abs, tag = 'smem constant byte address 0x4 - core index']
  #allocation1 [shape = 'u32[144,128]{1,0:T(1,128)}', space=vmem, size = 0x12000, scoped, tag = 'internal scratch']
  %s0 = inlined_call_operand.hbm [shape: f32[2,16,64], index: 0, kind: input, shape index: {}, may-alias: {0,2}]
  %s1 = inlined_call_operand.vmem [shape: f32[1,64], index: 1, kind: input, shape index: {}]
  %s2 = inlined_call_operand.hbm [shape: f32[2,16,64], index: 2, kind: output, shape index: {}, may-alias: {0,2}]
  %s3 = sld [smem:[#allocation0]]
  $region45: #{transformer_forward.5} parent=0
    _
  %s5 = ssub.s32 1, %s3
  %s6 = scalar_select 0, %s5, %s3
  $region1: #{transformer_forward.5} parent=0
    #allocation2 [shape = 'u8[16384]{0}', space=vmem, size = 0x4000, scoped, tag = 'input window, operand 0']
    #allocation3 [shape = 's32[2]{0}', space=sflag, size = 0x8, scoped, tag = 'scoped memory for transformer_forward.5']
    #allocation4 [shape = 's32[2]{0}', space=sflag, size = 0x8, scoped, tag = 'scoped memory for transformer_forward.5']
    #allocation5 [shape = 'u8[16384]{0}', space=vmem, size = 0x4000, scoped, tag = 'output window, operand 0']
    %7 = vsyncpa [#allocation3], 0
    %s8 = scalar_lea.sflag [#allocation3], 1
    %9 = vsyncpa %s8, 0
    %10 = vsyncpa [#allocation4], 0
    %s11 = scalar_lea.sflag [#allocation4], 1
    %12 = vsyncpa %s11, 0
    loop: start=0, step=1, limit=4
    $region2: #{transformer_forward.5} parent=1 // loop_pre_header
      _
    $region3: #{transformer_forward.5} parent=1 // loop_header
      %s14 = sphi 0, %s18
      %p15 = scmp.ge.s32.totalorder %s14, 4
      %s24 = sphi 0, %s26
      %s27 = sphi 0, %s24
      %s28 = sphi 0, %s27
      %s44 = sphi 0, %s28
      %s48 = sphi 0, %s48
      %s50 = sphi 0, %s48
      %s51 = sphi 0, %s50
      %s65 = sphi 0, %s51
      %s71 = sphi 0, %s73
      %s74 = sphi 0, %s71
      %s75 = sphi 0, %s74
      %s91 = sphi 0, %s75
    $region4: #{transformer_forward.5} parent=1 // loop_header_branch
      %17 = sbr.rel (%p15) target = $region8
    $region5: #{transformer_forward.5} parent=1 // loop_body
      %s19 = ssub.s32 %s14, 1
      %s20 = ssub.s32 %s14, 2
      %s21 = sadd.s32 %s14, 1
      %s22 = ssub.s32 %s14, %s21
      %p23 = scmp.eq.s32.totalorder %s22, 0
      %s25 = sadd.s32 %s24, 1
      %s26 = scalar_select %p23, %s24, %s25
      %p29 = pneg %p23
      %p30 = scmp.eq.s32.totalorder %s14, 1
      %p31 = por %p29, %p30
      %p32 = scmp.ne.s32.totalorder %s24, %s27
      %p33 = scmp.eq.s32.totalorder %s14, 0
      %p34 = por %p32, %p33
      %p35 = scmp.ne.s32.totalorder %s24, %s27
      %p36 = scmp.eq.s32.totalorder %s19, 1
      %p37 = por %p35, %p36
      %p38 = scmp.ne.s32.totalorder %s27, %s28
      %p39 = scmp.eq.s32.totalorder %s19, 0
      %p40 = por %p38, %p39
      %p41 = scmp.ne.s32.totalorder %s27, %s28
      %p42 = scmp.eq.s32.totalorder %s20, 1
      %p43 = por %p41, %p42
      %p45 = scmp.ne.s32.totalorder %s28, %s44
      %p46 = scmp.eq.s32.totalorder %s20, 0
      %p47 = por %p45, %p46
      %s49 = sadd.s32 %s48, 1
      %p52 = scmp.eq.s32.totalorder %s14, 1
      %p53 = scmp.ne.s32.totalorder %s48, %s50
      %p54 = scmp.eq.s32.totalorder %s14, 0
      %p55 = por %p53, %p54
      %p56 = scmp.ne.s32.totalorder %s48, %s50
      %p57 = scmp.eq.s32.totalorder %s19, 1
      %p58 = por %p56, %p57
      %p59 = scmp.ne.s32.totalorder %s50, %s51
      %p60 = scmp.eq.s32.totalorder %s19, 0
      %p61 = por %p59, %p60
      %p62 = scmp.ne.s32.totalorder %s50, %s51
      %p63 = scmp.eq.s32.totalorder %s20, 1
      %p64 = por %p62, %p63
      %p66 = scmp.ne.s32.totalorder %s51, %s65
      %p67 = scmp.eq.s32.totalorder %s20, 0
      %p68 = por %p66, %p67
      %s69 = ssub.s32 %s14, %s21
      %p70 = scmp.eq.s32.totalorder %s69, 0
      %s72 = sadd.s32 %s71, 1
      %s73 = scalar_select %p70, %s71, %s72
      %p76 = pneg %p70
      %p77 = scmp.eq.s32.totalorder %s14, 1
      %p78 = por %p76, %p77
      %p79 = scmp.ne.s32.totalorder %s71, %s74
      %p80 = scmp.eq.s32.totalorder %s14, 0
      %p81 = por %p79, %p80
      %p82 = scmp.ne.s32.totalorder %s71, %s74
      %p83 = scmp.eq.s32.totalorder %s19, 1
      %p84 = por %p82, %p83
      %p85 = scmp.ne.s32.totalorder %s74, %s75
      %p86 = scmp.eq.s32.totalorder %s19, 0
      %p87 = por %p85, %p86
      %p88 = scmp.ne.s32.totalorder %s74, %s75
      %p89 = scmp.eq.s32.totalorder %s20, 1
      %p90 = por %p88, %p89
      %p92 = scmp.ne.s32.totalorder %s75, %s91
      %p93 = scmp.eq.s32.totalorder %s20, 0
      %p94 = por %p92, %p93
      %p95 = scmp.le.s32.totalorder 1, %s14
      %p96 = scmp.lt.s32.totalorder %s14, 3
      %p97 = pnand %p95, %p96
      %p98 = pneg %p97
      // Predicated region
      $region9: #{transformer_forward.5} parent=5 // pred_check
        _
      $region10: #{transformer_forward.5} parent=5 // pred_check_branch
        %100 = sbr.rel (%p97) target = $region12
      $region11: #{transformer_forward.5} parent=5 // pred_region
        %s101 = ssub.s32 %s14, 1
        // Predicated region
        $region13: #{transformer_forward.5} parent=11 // pred_check
          %p102 = pneg %p61
        $region14: #{transformer_forward.5} parent=11 // pred_check_branch
          %104 = sbr.rel (%p102) target = $region16
        $region15: #{transformer_forward.5} parent=11 // pred_region
          _
        $region16: #{transformer_forward.5} parent=11 // pred_fallthru
          _
      $region12: #{transformer_forward.5} parent=5 // pred_fallthru
        _
      %p105 = scmp.lt.s32.totalorder %s14, 2
      // Predicated region
      $region17: #{transformer_forward.5} parent=5 // pred_check
        %p106 = pneg %p105
      $region18: #{transformer_forward.5} parent=5 // pred_check_branch
        %108 = sbr.rel (%p106) target = $region20
      $region19: #{transformer_forward.5} parent=5 // pred_region
        // Predicated region
        $region21: #{transformer_forward.5} parent=19 // pred_check
          %p109 = pneg %p34
        $region22: #{transformer_forward.5} parent=19 // pred_check_branch
          %111 = sbr.rel (%p109) target = $region24
        $region23: #{transformer_forward.5} parent=19 // pred_region
          %s112 = sand.u32 %s24, 1
          %s113 = scalar_lea.sflag [#allocation3], %s112
          %s114 = sand.u32 %s24, 1
          %s115 = smul.addr %s114, 16
          %s116 = scalar_lea.vmem [#allocation2], %s115
          %s118 = ssub.s32 256, 256
          %119 = vsyncadd %s113, %s118
          %s120 = smul.addr %s14, 2
          %s121 = smul.addr %s120, 128
          %s122 = scalar_lea.hbm %s0, %s121
          %s123 = sshll.u32 %s116, 4
          %s124 = int_to_ptr.vmem [resolvable:$true] %s123
          %129 = dma.hbm_to_vmem [thread:$0]  %s122, 256, %s124, %s113, 128, 128, 8
        $region24: #{transformer_forward.5} parent=19 // pred_fallthru
          _
      $region20: #{transformer_forward.5} parent=5 // pred_fallthru
        _
      %p130 = scmp.le.s32.totalorder 1, %s14
      %p131 = scmp.lt.s32.totalorder %s14, 3
      %p132 = pnand %p130, %p131
      %p133 = pneg %p132
      // Predicated region
      $region25: #{transformer_forward.5} parent=5 // pred_check
        _
      $region26: #{transformer_forward.5} parent=5 // pred_check_branch
        %135 = sbr.rel (%p132) target = $region28
      $region27: #{transformer_forward.5} parent=5 // pred_region
        %s136 = ssub.s32 %s14, 1
        %s137 = sand.u32 %s27, 1
        %s138 = scalar_lea.sflag [#allocation3], %s137
        %s139 = sand.u32 %s27, 1
        %s140 = smul.addr %s139, 16
        %s141 = scalar_lea.vmem [#allocation2], %s140
        // Predicated region
        $region29: #{transformer_forward.5} parent=27 // pred_check
          %p142 = pneg %p40
        $region30: #{transformer_forward.5} parent=27 // pred_check_branch
          %144 = sbr.rel (%p142) target = $region32
        $region31: #{transformer_forward.5} parent=27 // pred_region
          %145 = dma.done %s138, 256
        $region32: #{transformer_forward.5} parent=27 // pred_fallthru
          _
        %s146 = sand.u32 %s27, 1
        %s147 = scalar_lea.sflag [#allocation3], %s146
        %s148 = sand.u32 %s27, 1
        %s149 = smul.addr %s148, 16
        %s150 = scalar_lea.vmem [#allocation2], %s149
        %p151 = pneg %p40
        %p152 = pneg %p37
        %p153 = pneg %p61
        %p154 = pneg %p58
        %p155 = pneg %p87
        %p156 = pneg %p84
        %s157 = sand.u32 %s74, 1
        %s158 = scalar_lea.sflag [#allocation4], %s157
        %s159 = sand.u32 %s74, 1
        %s160 = smul.addr %s159, 16
        %s161 = scalar_lea.vmem [#allocation5], %s160
        %v162 = vld [vmem:[%s141] sm:$0xff]
        %v163 = vld [vmem:[%s141 + $0x8] sm:$0xff]
        %v164 = vmul.f32 %v162, %v162
        %v165 = vmul.f32 %v163, %v163
        %vm166 = vcmask 523264
        %v167 = vsel %vm166, %v164, 0.0
        %168 = vadd.xlane.f32.xlu0 %v167
        %v169 = vpop.xlane.xlu0 %168
        %v170 = vsel %vm166, %v165, 0.0
        %171 = vadd.xlane.f32.xlu0 %v170
        %v172 = vpop.xlane.xlu0 %171
        %v173 = vrcp.pop 64.0
        %v174 = vmul.f32 %v169, %v173
        %v175 = vmul.f32 %v172, %v173
        %v176 = vadd.f32 %v174, 1e-06
        %v177 = vadd.f32 %v175, 1e-06
        %v178 = vrsqrt.pop %v176
        %v179 = vrsqrt.pop %v177
        %v180 = vmul.f32 %v162, %v178
        %v181 = vmul.f32 %v163, %v179
        %v182 = vld [vmem:[%s1] sm:$0x1]
        %v184 = vlaneseq
        %v185 = vshrl.u32 %v184, 7
        %v186 = vsub.s32 0, %v185
        %v187 = vrot.slane %v182, %v186
        %v189 = vmul.f32 %v180, %v187
        %v190 = vmul.f32 %v181, %v187
        %191 = vst.msk [vmem:[%s161] sm:$0xff] %vm166, %v189
        %192 = vst.msk [vmem:[%s161 + $0x8] sm:$0xff] %vm166, %v190
        %s193 = sand.u32 %s74, 1
        %s194 = scalar_lea.sflag [#allocation4], %s193
        %s195 = sand.u32 %s74, 1
        %s196 = smul.addr %s195, 16
        %s197 = scalar_lea.vmem [#allocation5], %s196
        // Predicated region
        $region33: #{transformer_forward.5} parent=27 // pred_check
          %p198 = pneg %p84
        $region34: #{transformer_forward.5} parent=27 // pred_check_branch
          %200 = sbr.rel (%p198) target = $region36
        $region35: #{transformer_forward.5} parent=27 // pred_region
          %s202 = ssub.s32 256, 256
          %203 = vsyncadd %s194, %s202
          %s204 = smul.addr %s19, 2
          %s205 = smul.addr %s204, 128
          %s206 = scalar_lea.hbm %s2, %s205
          %s207 = sshll.u32 %s197, 4
          %s208 = int_to_ptr.vmem [resolvable:$true] %s207
          %213 = dma.vmem_to_hbm [thread:$0]  %s208, 256, %s206, %s194, 128, 128, 8
        $region36: #{transformer_forward.5} parent=27 // pred_fallthru
          _
      $region28: #{transformer_forward.5} parent=5 // pred_fallthru
        _
      %p214 = scmp.le.s32.totalorder 2, %s14
      // Predicated region
      $region37: #{transformer_forward.5} parent=5 // pred_check
        %p215 = pneg %p214
      $region38: #{transformer_forward.5} parent=5 // pred_check_branch
        %217 = sbr.rel (%p215) target = $region40
      $region39: #{transformer_forward.5} parent=5 // pred_region
        %s218 = ssub.s32 %s14, 2
        // Predicated region
        $region41: #{transformer_forward.5} parent=39 // pred_check
          %p219 = pneg %p90
        $region42: #{transformer_forward.5} parent=39 // pred_check_branch
          %221 = sbr.rel (%p219) target = $region44
        $region43: #{transformer_forward.5} parent=39 // pred_region
          %s222 = sand.u32 %s75, 1
          %s223 = scalar_lea.sflag [#allocation4], %s222
          %s224 = sand.u32 %s75, 1
          %s225 = smul.addr %s224, 16
          %s226 = scalar_lea.vmem [#allocation5], %s225
          %227 = dma.done %s223, 256
        $region44: #{transformer_forward.5} parent=39 // pred_fallthru
          _
      $region40: #{transformer_forward.5} parent=5 // pred_fallthru
        _
    $region6: #{transformer_forward.5} parent=1 // loop_footer
      %s18 = sadd.s32 1, %s14
    $region7: #{transformer_forward.5} parent=1 // loop_footer_branch
      %13 = sbr.rel target = $region3
    $region8: #{transformer_forward.5} parent=1 // loop_exit
      _
    %228 = vsyncpa [#allocation3], 1
    %s229 = scalar_lea.sflag [#allocation3], 1
    %230 = vsyncpa %s229, 1
    %231 = vsyncpa [#allocation4], 1
    %s232 = scalar_lea.sflag [#allocation4], 1
    %233 = vsyncpa %s232, 1

// kernel: transformer_forward.3
$region0: #{transformer_forward.3}
  #allocation0 [shape = 'u32[]', space=smem, size = 0x4, offset = 0x4, fixed_abs, tag = 'smem constant byte address 0x4 - core index']
  #allocation1 [shape = 'u32[144,128]{1,0:T(1,128)}', space=vmem, size = 0x12000, scoped, tag = 'internal scratch']
  %s0 = inlined_call_operand.vmem [shape: f32[2,16,64], index: 0, kind: input, shape index: {}, may-alias: {0,10}]
  %s1 = inlined_call_operand.vmem [shape: f32[1,64], index: 1, kind: input, shape index: {}]
  %s2 = inlined_call_operand.vmem [shape: f32[1,64], index: 2, kind: input, shape index: {}]
  %s3 = inlined_call_operand.vmem [shape: f32[64,192], index: 3, kind: input, shape index: {}]
  %s4 = inlined_call_operand.vmem [shape: f32[64,64], index: 4, kind: input, shape index: {}]
  %s5 = inlined_call_operand.vmem [shape: f32[64,256], index: 5, kind: input, shape index: {}]
  %s6 = inlined_call_operand.vmem [shape: f32[64,256], index: 6, kind: input, shape index: {}]
  %s7 = inlined_call_operand.vmem [shape: f32[256,64], index: 7, kind: input, shape index: {}]
  %s8 = inlined_call_operand.vmem [shape: f32[16,8], index: 8, kind: input, shape index: {}]
  %s9 = inlined_call_operand.vmem [shape: f32[16,8], index: 9, kind: input, shape index: {}]
  %s10 = inlined_call_operand.vmem [shape: f32[2,16,64], index: 10, kind: output, shape index: {}, may-alias: {0,10}]
  %s11 = sld [smem:[#allocation0]]
  $region73: #{transformer_forward.3} parent=0
    _
  %s13 = ssub.s32 1, %s11
  %s14 = scalar_select 0, %s13, %s11
  loop: start=0, step=1, limit=4
  $region2: #{transformer_forward.3} parent=0 // loop_pre_header
    _
  $region3: #{transformer_forward.3} parent=0 // loop_header
    %s16 = sphi 0, %s20
    %p17 = scmp.ge.s32.totalorder %s16, 4
    %s26 = sphi 0, %s28
    %s29 = sphi 0, %s26
    %s30 = sphi 0, %s29
    %s46 = sphi 0, %s30
    %s50 = sphi 0, %s50
    %s52 = sphi 0, %s50
    %s53 = sphi 0, %s52
    %s67 = sphi 0, %s53
    %s71 = sphi 0, %s71
    %s73 = sphi 0, %s71
    %s74 = sphi 0, %s73
    %s88 = sphi 0, %s74
    %s92 = sphi 0, %s92
    %s94 = sphi 0, %s92
    %s95 = sphi 0, %s94
    %s109 = sphi 0, %s95
    %s113 = sphi 0, %s113
    %s115 = sphi 0, %s113
    %s116 = sphi 0, %s115
    %s130 = sphi 0, %s116
    %s134 = sphi 0, %s134
    %s136 = sphi 0, %s134
    %s137 = sphi 0, %s136
    %s151 = sphi 0, %s137
    %s155 = sphi 0, %s155
    %s157 = sphi 0, %s155
    %s158 = sphi 0, %s157
    %s172 = sphi 0, %s158
    %s176 = sphi 0, %s176
    %s178 = sphi 0, %s176
    %s179 = sphi 0, %s178
    %s193 = sphi 0, %s179
    %s197 = sphi 0, %s197
    %s199 = sphi 0, %s197
    %s200 = sphi 0, %s199
    %s214 = sphi 0, %s200
    %s218 = sphi 0, %s218
    %s220 = sphi 0, %s218
    %s221 = sphi 0, %s220
    %s235 = sphi 0, %s221
    %s241 = sphi 0, %s243
    %s244 = sphi 0, %s241
    %s245 = sphi 0, %s244
    %s261 = sphi 0, %s245
  $region4: #{transformer_forward.3} parent=0 // loop_header_branch
    %19 = sbr.rel (%p17) target = $region8
  $region5: #{transformer_forward.3} parent=0 // loop_body
    %s21 = ssub.s32 %s16, 1
    %s22 = ssub.s32 %s16, 2
    %s23 = sadd.s32 %s16, 1
    %s24 = ssub.s32 %s16, %s23
    %p25 = scmp.eq.s32.totalorder %s24, 0
    %s27 = sadd.s32 %s26, 1
    %s28 = scalar_select %p25, %s26, %s27
    %p31 = pneg %p25
    %p32 = scmp.eq.s32.totalorder %s16, 1
    %p33 = por %p31, %p32
    %p34 = scmp.ne.s32.totalorder %s26, %s29
    %p35 = scmp.eq.s32.totalorder %s16, 0
    %p36 = por %p34, %p35
    %p37 = scmp.ne.s32.totalorder %s26, %s29
    %p38 = scmp.eq.s32.totalorder %s21, 1
    %p39 = por %p37, %p38
    %p40 = scmp.ne.s32.totalorder %s29, %s30
    %p41 = scmp.eq.s32.totalorder %s21, 0
    %p42 = por %p40, %p41
    %p43 = scmp.ne.s32.totalorder %s29, %s30
    %p44 = scmp.eq.s32.totalorder %s22, 1
    %p45 = por %p43, %p44
    %p47 = scmp.ne.s32.totalorder %s30, %s46
    %p48 = scmp.eq.s32.totalorder %s22, 0
    %p49 = por %p47, %p48
    %s51 = sadd.s32 %s50, 1
    %p54 = scmp.eq.s32.totalorder %s16, 1
    %p55 = scmp.ne.s32.totalorder %s50, %s52
    %p56 = scmp.eq.s32.totalorder %s16, 0
    %p57 = por %p55, %p56
    %p58 = scmp.ne.s32.totalorder %s50, %s52
    %p59 = scmp.eq.s32.totalorder %s21, 1
    %p60 = por %p58, %p59
    %p61 = scmp.ne.s32.totalorder %s52, %s53
    %p62 = scmp.eq.s32.totalorder %s21, 0
    %p63 = por %p61, %p62
    %p64 = scmp.ne.s32.totalorder %s52, %s53
    %p65 = scmp.eq.s32.totalorder %s22, 1
    %p66 = por %p64, %p65
    %p68 = scmp.ne.s32.totalorder %s53, %s67
    %p69 = scmp.eq.s32.totalorder %s22, 0
    %p70 = por %p68, %p69
    %s72 = sadd.s32 %s71, 1
    %p75 = scmp.eq.s32.totalorder %s16, 1
    %p76 = scmp.ne.s32.totalorder %s71, %s73
    %p77 = scmp.eq.s32.totalorder %s16, 0
    %p78 = por %p76, %p77
    %p79 = scmp.ne.s32.totalorder %s71, %s73
    %p80 = scmp.eq.s32.totalorder %s21, 1
    %p81 = por %p79, %p80
    %p82 = scmp.ne.s32.totalorder %s73, %s74
    %p83 = scmp.eq.s32.totalorder %s21, 0
    %p84 = por %p82, %p83
    %p85 = scmp.ne.s32.totalorder %s73, %s74
    %p86 = scmp.eq.s32.totalorder %s22, 1
    %p87 = por %p85, %p86
    %p89 = scmp.ne.s32.totalorder %s74, %s88
    %p90 = scmp.eq.s32.totalorder %s22, 0
    %p91 = por %p89, %p90
    %s93 = sadd.s32 %s92, 1
    %p96 = scmp.eq.s32.totalorder %s16, 1
    %p97 = scmp.ne.s32.totalorder %s92, %s94
    %p98 = scmp.eq.s32.totalorder %s16, 0
    %p99 = por %p97, %p98
    %p100 = scmp.ne.s32.totalorder %s92, %s94
    %p101 = scmp.eq.s32.totalorder %s21, 1
    %p102 = por %p100, %p101
    %p103 = scmp.ne.s32.totalorder %s94, %s95
    %p104 = scmp.eq.s32.totalorder %s21, 0
    %p105 = por %p103, %p104
    %p106 = scmp.ne.s32.totalorder %s94, %s95
    %p107 = scmp.eq.s32.totalorder %s22, 1
    %p108 = por %p106, %p107
    %p110 = scmp.ne.s32.totalorder %s95, %s109
    %p111 = scmp.eq.s32.totalorder %s22, 0
    %p112 = por %p110, %p111
    %s114 = sadd.s32 %s113, 1
    %p117 = scmp.eq.s32.totalorder %s16, 1
    %p118 = scmp.ne.s32.totalorder %s113, %s115
    %p119 = scmp.eq.s32.totalorder %s16, 0
    %p120 = por %p118, %p119
    %p121 = scmp.ne.s32.totalorder %s113, %s115
    %p122 = scmp.eq.s32.totalorder %s21, 1
    %p123 = por %p121, %p122
    %p124 = scmp.ne.s32.totalorder %s115, %s116
    %p125 = scmp.eq.s32.totalorder %s21, 0
    %p126 = por %p124, %p125
    %p127 = scmp.ne.s32.totalorder %s115, %s116
    %p128 = scmp.eq.s32.totalorder %s22, 1
    %p129 = por %p127, %p128
    %p131 = scmp.ne.s32.totalorder %s116, %s130
    %p132 = scmp.eq.s32.totalorder %s22, 0
    %p133 = por %p131, %p132
    %s135 = sadd.s32 %s134, 1
    %p138 = scmp.eq.s32.totalorder %s16, 1
    %p139 = scmp.ne.s32.totalorder %s134, %s136
    %p140 = scmp.eq.s32.totalorder %s16, 0
    %p141 = por %p139, %p140
    %p142 = scmp.ne.s32.totalorder %s134, %s136
    %p143 = scmp.eq.s32.totalorder %s21, 1
    %p144 = por %p142, %p143
    %p145 = scmp.ne.s32.totalorder %s136, %s137
    %p146 = scmp.eq.s32.totalorder %s21, 0
    %p147 = por %p145, %p146
    %p148 = scmp.ne.s32.totalorder %s136, %s137
    %p149 = scmp.eq.s32.totalorder %s22, 1
    %p150 = por %p148, %p149
    %p152 = scmp.ne.s32.totalorder %s137, %s151
    %p153 = scmp.eq.s32.totalorder %s22, 0
    %p154 = por %p152, %p153
    %s156 = sadd.s32 %s155, 1
    %p159 = scmp.eq.s32.totalorder %s16, 1
    %p160 = scmp.ne.s32.totalorder %s155, %s157
    %p161 = scmp.eq.s32.totalorder %s16, 0
    %p162 = por %p160, %p161
    %p163 = scmp.ne.s32.totalorder %s155, %s157
    %p164 = scmp.eq.s32.totalorder %s21, 1
    %p165 = por %p163, %p164
    %p166 = scmp.ne.s32.totalorder %s157, %s158
    %p167 = scmp.eq.s32.totalorder %s21, 0
    %p168 = por %p166, %p167
    %p169 = scmp.ne.s32.totalorder %s157, %s158
    %p170 = scmp.eq.s32.totalorder %s22, 1
    %p171 = por %p169, %p170
    %p173 = scmp.ne.s32.totalorder %s158, %s172
    %p174 = scmp.eq.s32.totalorder %s22, 0
    %p175 = por %p173, %p174
    %s177 = sadd.s32 %s176, 1
    %p180 = scmp.eq.s32.totalorder %s16, 1
    %p181 = scmp.ne.s32.totalorder %s176, %s178
    %p182 = scmp.eq.s32.totalorder %s16, 0
    %p183 = por %p181, %p182
    %p184 = scmp.ne.s32.totalorder %s176, %s178
    %p185 = scmp.eq.s32.totalorder %s21, 1
    %p186 = por %p184, %p185
    %p187 = scmp.ne.s32.totalorder %s178, %s179
    %p188 = scmp.eq.s32.totalorder %s21, 0
    %p189 = por %p187, %p188
    %p190 = scmp.ne.s32.totalorder %s178, %s179
    %p191 = scmp.eq.s32.totalorder %s22, 1
    %p192 = por %p190, %p191
    %p194 = scmp.ne.s32.totalorder %s179, %s193
    %p195 = scmp.eq.s32.totalorder %s22, 0
    %p196 = por %p194, %p195
    %s198 = sadd.s32 %s197, 1
    %p201 = scmp.eq.s32.totalorder %s16, 1
    %p202 = scmp.ne.s32.totalorder %s197, %s199
    %p203 = scmp.eq.s32.totalorder %s16, 0
    %p204 = por %p202, %p203
    %p205 = scmp.ne.s32.totalorder %s197, %s199
    %p206 = scmp.eq.s32.totalorder %s21, 1
    %p207 = por %p205, %p206
    %p208 = scmp.ne.s32.totalorder %s199, %s200
    %p209 = scmp.eq.s32.totalorder %s21, 0
    %p210 = por %p208, %p209
    %p211 = scmp.ne.s32.totalorder %s199, %s200
    %p212 = scmp.eq.s32.totalorder %s22, 1
    %p213 = por %p211, %p212
    %p215 = scmp.ne.s32.totalorder %s200, %s214
    %p216 = scmp.eq.s32.totalorder %s22, 0
    %p217 = por %p215, %p216
    %s219 = sadd.s32 %s218, 1
    %p222 = scmp.eq.s32.totalorder %s16, 1
    %p223 = scmp.ne.s32.totalorder %s218, %s220
    %p224 = scmp.eq.s32.totalorder %s16, 0
    %p225 = por %p223, %p224
    %p226 = scmp.ne.s32.totalorder %s218, %s220
    %p227 = scmp.eq.s32.totalorder %s21, 1
    %p228 = por %p226, %p227
    %p229 = scmp.ne.s32.totalorder %s220, %s221
    %p230 = scmp.eq.s32.totalorder %s21, 0
    %p231 = por %p229, %p230
    %p232 = scmp.ne.s32.totalorder %s220, %s221
    %p233 = scmp.eq.s32.totalorder %s22, 1
    %p234 = por %p232, %p233
    %p236 = scmp.ne.s32.totalorder %s221, %s235
    %p237 = scmp.eq.s32.totalorder %s22, 0
    %p238 = por %p236, %p237
    %s239 = ssub.s32 %s16, %s23
    %p240 = scmp.eq.s32.totalorder %s239, 0
    %s242 = sadd.s32 %s241, 1
    %s243 = scalar_select %p240, %s241, %s242
    %p246 = pneg %p240
    %p247 = scmp.eq.s32.totalorder %s16, 1
    %p248 = por %p246, %p247
    %p249 = scmp.ne.s32.totalorder %s241, %s244
    %p250 = scmp.eq.s32.totalorder %s16, 0
    %p251 = por %p249, %p250
    %p252 = scmp.ne.s32.totalorder %s241, %s244
    %p253 = scmp.eq.s32.totalorder %s21, 1
    %p254 = por %p252, %p253
    %p255 = scmp.ne.s32.totalorder %s244, %s245
    %p256 = scmp.eq.s32.totalorder %s21, 0
    %p257 = por %p255, %p256
    %p258 = scmp.ne.s32.totalorder %s244, %s245
    %p259 = scmp.eq.s32.totalorder %s22, 1
    %p260 = por %p258, %p259
    %p262 = scmp.ne.s32.totalorder %s245, %s261
    %p263 = scmp.eq.s32.totalorder %s22, 0
    %p264 = por %p262, %p263
    %p265 = scmp.le.s32.totalorder 1, %s16
    %p266 = scmp.lt.s32.totalorder %s16, 3
    %p267 = pnand %p265, %p266
    %p268 = pneg %p267
    // Predicated region
    $region9: #{transformer_forward.3} parent=5 // pred_check
      _
    $region10: #{transformer_forward.3} parent=5 // pred_check_branch
      %270 = sbr.rel (%p267) target = $region12
    $region11: #{transformer_forward.3} parent=5 // pred_region
      %s271 = ssub.s32 %s16, 1
      // Predicated region
      $region13: #{transformer_forward.3} parent=11 // pred_check
        %p272 = pneg %p63
      $region14: #{transformer_forward.3} parent=11 // pred_check_branch
        %274 = sbr.rel (%p272) target = $region16
      $region15: #{transformer_forward.3} parent=11 // pred_region
        _
      $region16: #{transformer_forward.3} parent=11 // pred_fallthru
        _
      // Predicated region
      $region17: #{transformer_forward.3} parent=11 // pred_check
        %p275 = pneg %p84
      $region18: #{transformer_forward.3} parent=11 // pred_check_branch
        %277 = sbr.rel (%p275) target = $region20
      $region19: #{transformer_forward.3} parent=11 // pred_region
        _
      $region20: #{transformer_forward.3} parent=11 // pred_fallthru
        _
      // Predicated region
      $region21: #{transformer_forward.3} parent=11 // pred_check
        %p278 = pneg %p105
      $region22: #{transformer_forward.3} parent=11 // pred_check_branch
        %280 = sbr.rel (%p278) target = $region24
      $region23: #{transformer_forward.3} parent=11 // pred_region
        _
      $region24: #{transformer_forward.3} parent=11 // pred_fallthru
        _
      // Predicated region
      $region25: #{transformer_forward.3} parent=11 // pred_check
        %p281 = pneg %p126
      $region26: #{transformer_forward.3} parent=11 // pred_check_branch
        %283 = sbr.rel (%p281) target = $region28
      $region27: #{transformer_forward.3} parent=11 // pred_region
        _
      $region28: #{transformer_forward.3} parent=11 // pred_fallthru
        _
      // Predicated region
      $region29: #{transformer_forward.3} parent=11 // pred_check
        %p284 = pneg %p147
      $region30: #{transformer_forward.3} parent=11 // pred_check_branch
        %286 = sbr.rel (%p284) target = $region32
      $region31: #{transformer_forward.3} parent=11 // pred_region
        _
      $region32: #{transformer_forward.3} parent=11 // pred_fallthru
        _
      // Predicated region
      $region33: #{transformer_forward.3} parent=11 // pred_check
        %p287 = pneg %p168
      $region34: #{transformer_forward.3} parent=11 // pred_check_branch
        %289 = sbr.rel (%p287) target = $region36
      $region35: #{transformer_forward.3} parent=11 // pred_region
        _
      $region36: #{transformer_forward.3} parent=11 // pred_fallthru
        _
      // Predicated region
      $region37: #{transformer_forward.3} parent=11 // pred_check
        %p290 = pneg %p189
      $region38: #{transformer_forward.3} parent=11 // pred_check_branch
        %292 = sbr.rel (%p290) target = $region40
      $region39: #{transformer_forward.3} parent=11 // pred_region
        _
      $region40: #{transformer_forward.3} parent=11 // pred_fallthru
        _
      // Predicated region
      $region41: #{transformer_forward.3} parent=11 // pred_check
        %p293 = pneg %p210
      $region42: #{transformer_forward.3} parent=11 // pred_check_branch
        %295 = sbr.rel (%p293) target = $region44
      $region43: #{transformer_forward.3} parent=11 // pred_region
        _
      $region44: #{transformer_forward.3} parent=11 // pred_fallthru
        _
      // Predicated region
      $region45: #{transformer_forward.3} parent=11 // pred_check
        %p296 = pneg %p231
      $region46: #{transformer_forward.3} parent=11 // pred_check_branch
        %298 = sbr.rel (%p296) target = $region48
      $region47: #{transformer_forward.3} parent=11 // pred_region
        _
      $region48: #{transformer_forward.3} parent=11 // pred_fallthru
        _
    $region12: #{transformer_forward.3} parent=5 // pred_fallthru
      _
    %p299 = scmp.lt.s32.totalorder %s16, 2
    // Predicated region
    $region49: #{transformer_forward.3} parent=5 // pred_check
      %p300 = pneg %p299
    $region50: #{transformer_forward.3} parent=5 // pred_check_branch
      %302 = sbr.rel (%p300) target = $region52
    $region51: #{transformer_forward.3} parent=5 // pred_region
      // Predicated region
      $region53: #{transformer_forward.3} parent=51 // pred_check
        %p303 = pneg %p36
      $region54: #{transformer_forward.3} parent=51 // pred_check_branch
        %305 = sbr.rel (%p303) target = $region56
      $region55: #{transformer_forward.3} parent=51 // pred_region
        %p306 = scmp.lt.s32.totalorder %s16, 1
        %s307 = scalar_select %p306, %s16, 1
        %s308 = smul.addr %s307, 2
        %s309 = smul.addr %s308, 8
        %s310 = scalar_lea.vmem %s0, %s309
      $region56: #{transformer_forward.3} parent=51 // pred_fallthru
        _
    $region52: #{transformer_forward.3} parent=5 // pred_fallthru
      _
    %p311 = scmp.le.s32.totalorder 1, %s16
    %p312 = scmp.lt.s32.totalorder %s16, 3
    %p313 = pnand %p311, %p312
    %p314 = pneg %p313
    // Predicated region
    $region57: #{transformer_forward.3} parent=5 // pred_check
      _
    $region58: #{transformer_forward.3} parent=5 // pred_check_branch
      %316 = sbr.rel (%p313) target = $region60
    $region59: #{transformer_forward.3} parent=5 // pred_region
      %s317 = ssub.s32 %s16, 1
      %p318 = scmp.lt.s32.totalorder %s21, 1
      %s319 = scalar_select %p318, %s21, 1
      %s320 = smul.addr %s319, 2
      %s321 = smul.addr %s320, 8
      %s322 = scalar_lea.vmem %s0, %s321
      %p323 = pneg %p42
      %p324 = pneg %p39
      %p325 = pneg %p63
      %p326 = pneg %p60
      %p327 = pneg %p84
      %p328 = pneg %p81
      %p329 = pneg %p105
      %p330 = pneg %p102
      %p331 = pneg %p126
      %p332 = pneg %p123
      %p333 = pneg %p147
      %p334 = pneg %p144
      %p335 = pneg %p168
      %p336 = pneg %p165
      %p337 = pneg %p189
      %p338 = pneg %p186
      %p339 = pneg %p210
      %p340 = pneg %p207
      %p341 = pneg %p231
      %p342 = pneg %p228
      %p343 = pneg %p257
      %p344 = pneg %p254
      %p345 = scmp.lt.s32.totalorder %s21, 1
      %s346 = scalar_select %p345, %s21, 1
      %s347 = smul.addr %s346, 2
      %s348 = smul.addr %s347, 8
      %s349 = scalar_lea.vmem %s10, %s348
      %p350 = scmp.lt.s32.totalorder %s21, 1
      %s351 = scalar_select %p350, %s21, 1
      %s352 = smul.addr %s351, 2
      %s353 = smul.addr %s352, 8
      %s354 = scalar_lea.vmem %s0, %s353
      %p355 = scmp.lt.s32.totalorder %s21, 1
      %s356 = scalar_select %p355, %s21, 1
      %s357 = smul.addr %s356, 2
      %s358 = smul.addr %s357, 8
      %s359 = scalar_lea.vmem %s10, %s358
      %v360 = vld [vmem:[%s354] sm:$0xff]
      %v361 = vld [vmem:[%s354 + $0x8] sm:$0xff]
      %v362 = vmul.f32 %v360, %v360
      %v363 = vmul.f32 %v361, %v361
      %vm364 = vcmask 523264
      %v365 = vsel %vm364, %v362, 0.0
      %366 = vadd.xlane.f32.xlu0 %v365
      %v367 = vpop.xlane.xlu0 %366
      %v368 = vsel %vm364, %v363, 0.0
      %369 = vadd.xlane.f32.xlu0 %v368
      %v370 = vpop.xlane.xlu0 %369
      %v371 = vrcp.pop 64.0
      %v372 = vmul.f32 %v367, %v371
      %v373 = vmul.f32 %v370, %v371
      %v374 = vadd.f32 %v372, 1e-06
      %v375 = vadd.f32 %v373, 1e-06
      %v376 = vrsqrt.pop %v374
      %v377 = vrsqrt.pop %v375
      %v378 = vmul.f32 %v360, %v376
      %v379 = vmul.f32 %v361, %v377
      %v380 = vld [vmem:[%s1] sm:$0x1]
      %v382 = vlaneseq
      %v383 = vshrl.u32 %v382, 7
      %v384 = vsub.s32 0, %v383
      %v385 = vrot.slane %v380, %v384
      %v387 = vmul.f32 %v378, %v385
      %v388 = vmul.f32 %v379, %v385
      %v389 = vld [vmem:[%s3] sm:$0xff]
      %v390 = vld [vmem:[%s3 + $0x8] sm:$0xff]
      %v391 = vld [vmem:[%s3 + $0x10] sm:$0xff]
      %v392 = vld [vmem:[%s3 + $0x18] sm:$0xff]
      %v393 = vld [vmem:[%s3 + $0x20] sm:$0xff]
      %v394 = vld [vmem:[%s3 + $0x28] sm:$0xff]
      %v395 = vld [vmem:[%s3 + $0x30] sm:$0xff]
      %v396 = vld [vmem:[%s3 + $0x38] sm:$0xff]
      %v397 = vld [vmem:[%s3 + $0x40] sm:$0xff]
      %v398 = vld [vmem:[%s3 + $0x48] sm:$0xff]
      %v399 = vld [vmem:[%s3 + $0x50] sm:$0xff]
      %v400 = vld [vmem:[%s3 + $0x58] sm:$0xff]
      %v401 = vld [vmem:[%s3 + $0x60] sm:$0xff]
      %v402 = vld [vmem:[%s3 + $0x68] sm:$0xff]
      %v403 = vld [vmem:[%s3 + $0x70] sm:$0xff]
      %v404 = vld [vmem:[%s3 + $0x78] sm:$0xff]
      %v406 = vsel %vm364, %v387, 0
      %v409 = vsel %vm364, %v388, 0
      %411 = vmatprep.subr.mxu0 %v390
      %412 = vmatpush1.msra.mxu0 %v389
      %413 = vmatprep.subr.mxu0 %v392
      %414 = vmatpush1.msra.mxu0 %v391
      %415 = vmatprep.subr.mxu0 %v394
      %416 = vmatpush1.msra.mxu0 %v393
      %417 = vmatprep.subr.mxu0 %v396
      %418 = vmatpush1.msra.mxu0 %v395
      %419 = vmatprep.subr.mxu0 %v398
      %420 = vmatpush1.msra.mxu0 %v397
      %421 = vmatprep.subr.mxu0 %v400
      %422 = vmatpush1.msra.mxu0 %v399
      %423 = vmatprep.subr.mxu0 %v402
      %424 = vmatpush1.msra.mxu0 %v401
      %425 = vmatprep.subr.mxu0 %v404
      %426 = vmatpush1.msra.mxu0 %v403
      %427 = vmatprep.subr.mxu0 0.0
      %428 = vmatpush1.msra.mxu0 0.0
      %429 = vmatprep.subr.mxu0 0.0
      %430 = vmatpush1.msra.mxu0 0.0
      %431 = vmatprep.subr.mxu0 0.0
      %432 = vmatpush1.msra.mxu0 0.0
      %433 = vmatprep.subr.mxu0 0.0
      %434 = vmatpush1.msra.mxu0 0.0
      %435 = vmatprep.subr.mxu0 0.0
      %436 = vmatpush1.msra.mxu0 0.0
      %437 = vmatprep.subr.mxu0 0.0
      %438 = vmatpush1.msra.mxu0 0.0
      %439 = vmatprep.subr.mxu0 0.0
      %440 = vmatpush1.msra.mxu0 0.0
      %441 = vmatprep.subr.mxu0 0.0
      %442 = vmatpush1.msra.mxu0 0.0
      %443 = vmatprep.subr.mxu0 0.0
      %444 = vmatpush1.msra.mxu0 0.0
      %445 = vmatprep.subr.mxu0 0.0
      %446 = vmatpush1.msra.mxu0 0.0
      %447 = vmatprep.subr.mxu0 0.0
      %448 = vmatpush1.msra.mxu0 0.0
      %449 = vmatprep.subr.mxu0 0.0
      %450 = vmatpush1.msra.mxu0 0.0
      %451 = vmatprep.subr.mxu0 0.0
      %452 = vmatpush1.msra.mxu0 0.0
      %453 = vmatprep.subr.mxu0 0.0
      %454 = vmatpush1.msra.mxu0 0.0
      %455 = vmatprep.subr.mxu0 0.0
      %456 = vmatpush1.msra.mxu0 0.0
      %457 = vmatprep.subr.mxu0 0.0
      %458 = vmatpush1.msra.mxu0 0.0
      %459 = vmatprep.subr.mxu0 0.0
      %460 = vmatpush1.msra.mxu0 0.0
      %461 = vmatprep.subr.mxu0 0.0
      %462 = vmatpush1.msra.mxu0 0.0
      %463 = vmatprep.subr.mxu0 0.0
      %464 = vmatpush1.msra.mxu0 0.0
      %465 = vmatprep.subr.mxu0 0.0
      %466 = vmatpush1.msra.mxu0 0.0
      %467 = vmatprep.subr.mxu0 0.0
      %468 = vmatpush1.msra.mxu0 0.0
      %469 = vmatprep.subr.mxu0 0.0
      %470 = vmatpush1.msra.mxu0 0.0
      %471 = vmatprep.subr.mxu0 0.0
      %472 = vmatpush1.msra.mxu0 0.0
      %473 = vmatprep.subr.mxu0 0.0
      %474 = vmatpush1.msra.mxu0 0.0
      %475 = vmatprep.mubr.f32.mxu0 0.0
      %476 = vmatmul.mubr.f32.gmra.mrb[0].mxu0 %v406
      %v477 = vpop.f32.mrb[0].mxu0
      %v478 = vadd.f32 0.0, %v477
      %v479 = vpop.f32.mrb[0].mxu0
      %v480 = vadd.f32 0.0, %v479
      %481 = vmatprep.mubr.f32.mxu0 0.0
      %482 = vmatmul.mubr.f32.gmra.mrb[0].mxu0 %v409
      %v483 = vpop.f32.mrb[0].mxu0
      %v484 = vadd.f32 0.0, %v483
      %v485 = vpop.f32.mrb[0].mxu0
      %v486 = vadd.f32 0.0, %v485
      %487 = vdwg.mxu0
      %v488 = vld [vmem:[%s8] sm:$0xff]
      %v489 = vld [vmem:[%s8 + $0x8] sm:$0xff]
      %v490 = vld [vmem:[%s9] sm:$0xff]
      %v491 = vld [vmem:[%s9 + $0x8] sm:$0xff]
      %v492 = vlaneseq
      %v493 = vshrl.u32 %v492, 7
      %v494 = vadd.s32 %v493, 8
      %v495 = vlaneseq
      %v496 = vand.u32 %v495, 127
      %vm497 = vcmp.le.s32.totalorder %v496, %v493
      %vm498 = vcmp.le.s32.totalorder %v496, %v494
      %v499 = vmul.f32 %v478, %v488
      %v500 = vmul.f32 %v484, %v489
      %503 = vrot.lane.b32.xlu0 %v490, 8
      %v504 = vpop.permute.xlu0 %503
      %505 = vrot.lane.b32.xlu0 %v491, 8
      %v506 = vpop.permute.xlu0 %505
      %v509 = vmul.f32 %v478, %v504
      %v510 = vmul.f32 %v484, %v506
      %513 = vrot.lane.b32.xlu0 %v509, 120
      %v514 = vpop.permute.xlu0 %513
      %515 = vrot.lane.b32.xlu0 %v510, 120
      %v516 = vpop.permute.xlu0 %515
      %v519 = vsub.f32 %v499, %v514
      %v520 = vsub.f32 %v500, %v516
      %v521 = vmul.f32 %v478, %v490
      %v522 = vmul.f32 %v484, %v491
      %525 = vrot.lane.b32.xlu0 %v488, 8
      %v526 = vpop.permute.xlu0 %525
      %527 = vrot.lane.b32.xlu0 %v489, 8
      %v528 = vpop.permute.xlu0 %527
      %v531 = vmul.f32 %v478, %v526
      %v532 = vmul.f32 %v484, %v528
      %535 = vrot.lane.b32.xlu0 %v531, 120
      %v536 = vpop.permute.xlu0 %535
      %537 = vrot.lane.b32.xlu0 %v532, 120
      %v538 = vpop.permute.xlu0 %537
      %v541 = vadd.f32 %v521, %v536
      %v542 = vadd.f32 %v522, %v538
      %545 = vrot.lane.b32.xlu0 %v541, 8
      %v546 = vpop.permute.xlu0 %545
      %547 = vrot.lane.b32.xlu0 %v542, 8
      %v548 = vpop.permute.xlu0 %547
      %vm551 = vcmask 64512
      %v552 = vsel %vm551, %v519, %v546
      %v553 = vsel %vm551, %v520, %v548
      %554 = vrot.lane.b32.xlu0 %v488, 64
      %v555 = vpop.permute.xlu0 %554
      %556 = vrot.lane.b32.xlu0 %v489, 64
      %v557 = vpop.permute.xlu0 %556
      %v560 = vmul.f32 %v478, %v555
      %v561 = vmul.f32 %v484, %v557
      %562 = vrot.lane.b32.xlu0 %v490, 72
      %v563 = vpop.permute.xlu0 %562
      %564 = vrot.lane.b32.xlu0 %v491, 72
      %v565 = vpop.permute.xlu0 %564
      %v568 = vmul.f32 %v478, %v563
      %v569 = vmul.f32 %v484, %v565
      %572 = vrot.lane.b32.xlu0 %v568, 120
      %v573 = vpop.permute.xlu0 %572
      %574 = vrot.lane.b32.xlu0 %v569, 120
      %v575 = vpop.permute.xlu0 %574
      %v578 = vsub.f32 %v560, %v573
      %v579 = vsub.f32 %v561, %v575
      %580 = vrot.lane.b32.xlu0 %v490, 64
      %v581 = vpop.permute.xlu0 %580
      %582 = vrot.lane.b32.xlu0 %v491, 64
      %v583 = vpop.permute.xlu0 %582
      %v586 = vmul.f32 %v478, %v581
      %v587 = vmul.f32 %v484, %v583
      %588 = vrot.lane.b32.xlu0 %v488, 72
      %v589 = vpop.permute.xlu0 %588
      %590 = vrot.lane.b32.xlu0 %v489, 72
      %v591 = vpop.permute.xlu0 %590
      %v594 = vmul.f32 %v478, %v589
      %v595 = vmul.f32 %v484, %v591
      %598 = vrot.lane.b32.xlu0 %v594, 120
      %v599 = vpop.permute.xlu0 %598
      %600 = vrot.lane.b32.xlu0 %v595, 120
      %v601 = vpop.permute.xlu0 %600
      %v604 = vadd.f32 %v586, %v599
      %v605 = vadd.f32 %v587, %v601
      %608 = vrot.lane.b32.xlu0 %v578, 64
      %v609 = vpop.permute.xlu0 %608
      %610 = vrot.lane.b32.xlu0 %v579, 64
      %v611 = vpop.permute.xlu0 %610
      %616 = vrot.lane.b32.xlu0 %v604, 72
      %v617 = vpop.permute.xlu0 %616
      %618 = vrot.lane.b32.xlu0 %v605, 72
      %v619 = vpop.permute.xlu0 %618
      %v622 = vsel %vm551, %v609, %v617
      %v623 = vsel %vm551, %v611, %v619
      %vm624 = vcmask 130048
      %v626 = vsel %vm624, %v552, 0
      %v629 = vsel %vm624, %v553, 0
      %v632 = vsel %vm624, %v622, 0
      %v635 = vsel %vm624, %v623, 0
      %637 = vmatprep.subr.mxu0 0.0
      %638 = vmatpush1.xpose.msra.mxu0 %v632
      %639 = vmatprep.subr.mxu0 0.0
      %640 = vmatpush1.xpose.msra.mxu0 %v635
      %641 = vmatprep.subr.mxu0 0.0
      %642 = vmatpush1.xpose.msra.mxu0 0.0
      %643 = vmatprep.subr.mxu0 0.0
      %644 = vmatpush1.xpose.msra.mxu0 0.0
      %645 = vmatprep.subr.mxu0 0.0
      %646 = vmatpush1.xpose.msra.mxu0 0.0
      %647 = vmatprep.subr.mxu0 0.0
      %648 = vmatpush1.xpose.msra.mxu0 0.0
      %649 = vmatprep.subr.mxu0 0.0
      %650 = vmatpush1.xpose.msra.mxu0 0.0
      %651 = vmatprep.subr.mxu0 0.0
      %652 = vmatpush1.xpose.msra.mxu0 0.0
      %653 = vmatprep.subr.mxu0 0.0
      %654 = vmatpush1.xpose.msra.mxu0 0.0
      %655 = vmatprep.subr.mxu0 0.0
      %656 = vmatpush1.xpose.msra.mxu0 0.0
      %657 = vmatprep.subr.mxu0 0.0
      %658 = vmatpush1.xpose.msra.mxu0 0.0
      %659 = vmatprep.subr.mxu0 0.0
      %660 = vmatpush1.xpose.msra.mxu0 0.0
      %661 = vmatprep.subr.mxu0 0.0
      %662 = vmatpush1.xpose.msra.mxu0 0.0
      %663 = vmatprep.subr.mxu0 0.0
      %664 = vmatpush1.xpose.msra.mxu0 0.0
      %665 = vmatprep.subr.mxu0 0.0
      %666 = vmatpush1.xpose.msra.mxu0 0.0
      %667 = vmatprep.subr.mxu0 0.0
      %668 = vmatpush1.xpose.msra.mxu0 0.0
      %669 = vmatprep.subr.mxu0 0.0
      %670 = vmatpush1.xpose.msra.mxu0 0.0
      %671 = vmatprep.subr.mxu0 0.0
      %672 = vmatpush1.xpose.msra.mxu0 0.0
      %673 = vmatprep.subr.mxu0 0.0
      %674 = vmatpush1.xpose.msra.mxu0 0.0
      %675 = vmatprep.subr.mxu0 0.0
      %676 = vmatpush1.xpose.msra.mxu0 0.0
      %677 = vmatprep.subr.mxu0 0.0
      %678 = vmatpush1.xpose.msra.mxu0 0.0
      %679 = vmatprep.subr.mxu0 0.0
      %680 = vmatpush1.xpose.msra.mxu0 0.0
      %681 = vmatprep.subr.mxu0 0.0
      %682 = vmatpush1.xpose.msra.mxu0 0.0
      %683 = vmatprep.subr.mxu0 0.0
      %684 = vmatpush1.xpose.msra.mxu0 0.0
      %685 = vmatprep.subr.mxu0 0.0
      %686 = vmatpush1.xpose.msra.mxu0 0.0
      %687 = vmatprep.subr.mxu0 0.0
      %688 = vmatpush1.xpose.msra.mxu0 0.0
      %689 = vmatprep.subr.mxu0 0.0
      %690 = vmatpush1.xpose.msra.mxu0 0.0
      %691 = vmatprep.subr.mxu0 0.0
      %692 = vmatpush1.xpose.msra.mxu0 0.0
      %693 = vmatprep.subr.mxu0 0.0
      %694 = vmatpush1.xpose.msra.mxu0 0.0
      %695 = vmatprep.subr.mxu0 0.0
      %696 = vmatpush1.xpose.msra.mxu0 0.0
      %697 = vmatprep.subr.mxu0 0.0
      %698 = vmatpush1.xpose.msra.mxu0 0.0
      %699 = vmatprep.subr.mxu0 0.0
      %700 = vmatpush1.xpose.msra.mxu0 0.0
      %701 = vmatprep.mubr.f32.mxu0 0.0
      %702 = vmatmul.mubr.f32.gmra.mrb[0].mxu0 %v626
      %v703 = vpop.f32.mrb[0].mxu0
      %v704 = vadd.f32 0.0, %v703
      %v705 = vpop.f32.mrb[0].mxu0
      %706 = vmatprep.mubr.f32.mxu0 0.0
      %707 = vmatmul.mubr.f32.gmra.mrb[0].mxu0 %v629
      %v708 = vpop.f32.mrb[0].mxu0
      %v709 = vadd.f32 0.0, %v708
      %v710 = vpop.f32.mrb[0].mxu0
      %711 = vdwg.mxu0
      %v712 = vmul.f32 %v704, 0.25
      %v713 = vmul.f32 %v709, 0.25
      %v714 = vsel %vm497, %v712, -inf
      %v715 = vsel %vm498, %v713, -inf
      %v716 = vsel %vm624, %v714, -inf
      %717 = vmax.xlane.f32.xlu0 %v716
      %v718 = vpop.xlane.xlu0 %717
      %v719 = vsel %vm624, %v715, -inf
      %720 = vmax.xlane.f32.xlu0 %v719
      %v721 = vpop.xlane.xlu0 %720
      %v722 = vsub.f32 %v714, %v718
      %v723 = vsub.f32 %v715, %v721
      %v724 = vmul.f32 %v722, 1.442695
      %v725 = vpow.pop %v724
      %v726 = vmul.f32 %v723, 1.442695
      %v727 = vpow.pop %v726
      %v728 = vsel %vm624, %v725, 0.0
      %729 = vadd.xlane.f32.xlu0 %v728
      %v730 = vpop.xlane.xlu0 %729
      %v731 = vsel %vm624, %v727, 0.0
      %732 = vadd.xlane.f32.xlu0 %v731
      %v733 = vpop.xlane.xlu0 %732
      %v734 = vrcp.pop %v730
      %v735 = vmul.f32 %v725, %v734
      %v736 = vrcp.pop %v733
      %v737 = vmul.f32 %v727, %v736
      %v739 = vsel %vm624, %v735, 0
      %v742 = vsel %vm624, %v737, 0
      %744 = vmatprep.subr.mxu0 0.0
      %745 = vmatpush1.msra.mxu0 %v480
      %746 = vmatprep.subr.mxu0 0.0
      %747 = vmatpush1.msra.mxu0 %v486
      %748 = vmatprep.subr.mxu0 0.0
      %749 = vmatpush1.msra.mxu0 0.0
      %750 = vmatprep.subr.mxu0 0.0
      %751 = vmatpush1.msra.mxu0 0.0
      %752 = vmatprep.subr.mxu0 0.0
      %753 = vmatpush1.msra.mxu0 0.0
      %754 = vmatprep.subr.mxu0 0.0
      %755 = vmatpush1.msra.mxu0 0.0
      %756 = vmatprep.subr.mxu0 0.0
      %757 = vmatpush1.msra.mxu0 0.0
      %758 = vmatprep.subr.mxu0 0.0
      %759 = vmatpush1.msra.mxu0 0.0
      %760 = vmatprep.subr.mxu0 0.0
      %761 = vmatpush1.msra.mxu0 0.0
      %762 = vmatprep.subr.mxu0 0.0
      %763 = vmatpush1.msra.mxu0 0.0
      %764 = vmatprep.subr.mxu0 0.0
      %765 = vmatpush1.msra.mxu0 0.0
      %766 = vmatprep.subr.mxu0 0.0
      %767 = vmatpush1.msra.mxu0 0.0
      %768 = vmatprep.subr.mxu0 0.0
      %769 = vmatpush1.msra.mxu0 0.0
      %770 = vmatprep.subr.mxu0 0.0
      %771 = vmatpush1.msra.mxu0 0.0
      %772 = vmatprep.subr.mxu0 0.0
      %773 = vmatpush1.msra.mxu0 0.0
      %774 = vmatprep.subr.mxu0 0.0
      %775 = vmatpush1.msra.mxu0 0.0
      %776 = vmatprep.subr.mxu0 0.0
      %777 = vmatpush1.msra.mxu0 0.0
      %778 = vmatprep.subr.mxu0 0.0
      %779 = vmatpush1.msra.mxu0 0.0
      %780 = vmatprep.subr.mxu0 0.0
      %781 = vmatpush1.msra.mxu0 0.0
      %782 = vmatprep.subr.mxu0 0.0
      %783 = vmatpush1.msra.mxu0 0.0
      %784 = vmatprep.subr.mxu0 0.0
      %785 = vmatpush1.msra.mxu0 0.0
      %786 = vmatprep.subr.mxu0 0.0
      %787 = vmatpush1.msra.mxu0 0.0
      %788 = vmatprep.subr.mxu0 0.0
      %789 = vmatpush1.msra.mxu0 0.0
      %790 = vmatprep.subr.mxu0 0.0
      %791 = vmatpush1.msra.mxu0 0.0
      %792 = vmatprep.subr.mxu0 0.0
      %793 = vmatpush1.msra.mxu0 0.0
      %794 = vmatprep.subr.mxu0 0.0
      %795 = vmatpush1.msra.mxu0 0.0
      %796 = vmatprep.subr.mxu0 0.0
      %797 = vmatpush1.msra.mxu0 0.0
      %798 = vmatprep.subr.mxu0 0.0
      %799 = vmatpush1.msra.mxu0 0.0
      %800 = vmatprep.subr.mxu0 0.0
      %801 = vmatpush1.msra.mxu0 0.0
      %802 = vmatprep.subr.mxu0 0.0
      %803 = vmatpush1.msra.mxu0 0.0
      %804 = vmatprep.subr.mxu0 0.0
      %805 = vmatpush1.msra.mxu0 0.0
      %806 = vmatprep.subr.mxu0 0.0
      %807 = vmatpush1.msra.mxu0 0.0
      %808 = vmatprep.mubr.f32.mxu0 0.0
      %809 = vmatmul.mubr.f32.gmra.mrb[0].mxu0 %v739
      %v810 = vpop.f32.mrb[0].mxu0
      %v811 = vadd.f32 0.0, %v810
      %v812 = vpop.f32.mrb[0].mxu0
      %813 = vmatprep.mubr.f32.mxu0 0.0
      %814 = vmatmul.mubr.f32.gmra.mrb[0].mxu0 %v742
      %v815 = vpop.f32.mrb[0].mxu0
      %v816 = vadd.f32 0.0, %v815
      %v817 = vpop.f32.mrb[0].mxu0
      %818 = vdwg.mxu0
      %819 = vrot.lane.b32.xlu0 %v488, 16
      %v820 = vpop.permute.xlu0 %819
      %821 = vrot.lane.b32.xlu0 %v489, 16
      %v822 = vpop.permute.xlu0 %821
      %v825 = vmul.f32 %v478, %v820
      %v826 = vmul.f32 %v484, %v822
      %827 = vrot.lane.b32.xlu0 %v490, 24
      %v828 = vpop.permute.xlu0 %827
      %829 = vrot.lane.b32.xlu0 %v491, 24
      %v830 = vpop.permute.xlu0 %829
      %v833 = vmul.f32 %v478, %v828
      %v834 = vmul.f32 %v484, %v830
      %837 = vrot.lane.b32.xlu0 %v833, 120
      %v838 = vpop.permute.xlu0 %837
      %839 = vrot.lane.b32.xlu0 %v834, 120
      %v840 = vpop.permute.xlu0 %839
      %v843 = vsub.f32 %v825, %v838
      %v844 = vsub.f32 %v826, %v840
      %845 = vrot.lane.b32.xlu0 %v490, 16
      %v846 = vpop.permute.xlu0 %845
      %847 = vrot.lane.b32.xlu0 %v491, 16
      %v848 = vpop.permute.xlu0 %847
      %v851 = vmul.f32 %v478, %v846
      %v852 = vmul.f32 %v484, %v848
      %853 = vrot.lane.b32.xlu0 %v488, 24
      %v854 = vpop.permute.xlu0 %853
      %855 = vrot.lane.b32.xlu0 %v489, 24
      %v856 = vpop.permute.xlu0 %855
      %v859 = vmul.f32 %v478, %v854
      %v860 = vmul.f32 %v484, %v856
      %863 = vrot.lane.b32.xlu0 %v859, 120
      %v864 = vpop.permute.xlu0 %863
      %865 = vrot.lane.b32.xlu0 %v860, 120
      %v866 = vpop.permute.xlu0 %865
      %v869 = vadd.f32 %v851, %v864
      %v870 = vadd.f32 %v852, %v866
      %873 = vrot.lane.b32.xlu0 %v843, 112
      %v874 = vpop.permute.xlu0 %873
      %875 = vrot.lane.b32.xlu0 %v844, 112
      %v876 = vpop.permute.xlu0 %875
      %881 = vrot.lane.b32.xlu0 %v869, 120
      %v882 = vpop.permute.xlu0 %881
      %883 = vrot.lane.b32.xlu0 %v870, 120
      %v884 = vpop.permute.xlu0 %883
      %v887 = vsel %vm551, %v874, %v882
      %v888 = vsel %vm551, %v876, %v884
      %889 = vrot.lane.b32.xlu0 %v488, 80
      %v890 = vpop.permute.xlu0 %889
      %891 = vrot.lane.b32.xlu0 %v489, 80
      %v892 = vpop.permute.xlu0 %891
      %v895 = vmul.f32 %v478, %v890
      %v896 = vmul.f32 %v484, %v892
      %897 = vrot.lane.b32.xlu0 %v490, 88
      %v898 = vpop.permute.xlu0 %897
      %899 = vrot.lane.b32.xlu0 %v491, 88
      %v900 = vpop.permute.xlu0 %899
      %v903 = vmul.f32 %v478, %v898
      %v904 = vmul.f32 %v484, %v900
      %907 = vrot.lane.b32.xlu0 %v903, 120
      %v908 = vpop.permute.xlu0 %907
      %909 = vrot.lane.b32.xlu0 %v904, 120
      %v910 = vpop.permute.xlu0 %909
      %v913 = vsub.f32 %v895, %v908
      %v914 = vsub.f32 %v896, %v910
      %915 = vrot.lane.b32.xlu0 %v490, 80
      %v916 = vpop.permute.xlu0 %915
      %917 = vrot.lane.b32.xlu0 %v491, 80
      %v918 = vpop.permute.xlu0 %917
      %v921 = vmul.f32 %v478, %v916
      %v922 = vmul.f32 %v484, %v918
      %923 = vrot.lane.b32.xlu0 %v488, 88
      %v924 = vpop.permute.xlu0 %923
      %925 = vrot.lane.b32.xlu0 %v489, 88
      %v926 = vpop.permute.xlu0 %925
      %v929 = vmul.f32 %v478, %v924
      %v930 = vmul.f32 %v484, %v926
      %933 = vrot.lane.b32.xlu0 %v929, 120
      %v934 = vpop.permute.xlu0 %933
      %935 = vrot.lane.b32.xlu0 %v930, 120
      %v936 = vpop.permute.xlu0 %935
      %v939 = vadd.f32 %v921, %v934
      %v940 = vadd.f32 %v922, %v936
      %943 = vrot.lane.b32.xlu0 %v913, 48
      %v944 = vpop.permute.xlu0 %943
      %945 = vrot.lane.b32.xlu0 %v914, 48
      %v946 = vpop.permute.xlu0 %945
      %951 = vrot.lane.b32.xlu0 %v939, 56
      %v952 = vpop.permute.xlu0 %951
      %953 = vrot.lane.b32.xlu0 %v940, 56
      %v954 = vpop.permute.xlu0 %953
      %v957 = vsel %vm551, %v944, %v952
      %v958 = vsel %vm551, %v946, %v954
      %v960 = vsel %vm624, %v887, 0
      %v963 = vsel %vm624, %v888, 0
      %v966 = vsel %vm624, %v957, 0
      %v969 = vsel %vm624, %v958, 0
      %971 = vmatprep.subr.mxu0 0.0
      %972 = vmatpush1.xpose.msra.mxu0 %v966
      %973 = vmatprep.subr.mxu0 0.0
      %974 = vmatpush1.xpose.msra.mxu0 %v969
      %975 = vmatprep.subr.mxu0 0.0
      %976 = vmatpush1.xpose.msra.mxu0 0.0
      %977 = vmatprep.subr.mxu0 0.0
      %978 = vmatpush1.xpose.msra.mxu0 0.0
      %979 = vmatprep.subr.mxu0 0.0
      %980 = vmatpush1.xpose.msra.mxu0 0.0
      %981 = vmatprep.subr.mxu0 0.0
      %982 = vmatpush1.xpose.msra.mxu0 0.0
      %983 = vmatprep.subr.mxu0 0.0
      %984 = vmatpush1.xpose.msra.mxu0 0.0
      %985 = vmatprep.subr.mxu0 0.0
      %986 = vmatpush1.xpose.msra.mxu0 0.0
      %987 = vmatprep.subr.mxu0 0.0
      %988 = vmatpush1.xpose.msra.mxu0 0.0
      %989 = vmatprep.subr.mxu0 0.0
      %990 = vmatpush1.xpose.msra.mxu0 0.0
      %991 = vmatprep.subr.mxu0 0.0
      %992 = vmatpush1.xpose.msra.mxu0 0.0
      %993 = vmatprep.subr.mxu0 0.0
      %994 = vmatpush1.xpose.msra.mxu0 0.0
      %995 = vmatprep.subr.mxu0 0.0
      %996 = vmatpush1.xpose.msra.mxu0 0.0
      %997 = vmatprep.subr.mxu0 0.0
      %998 = vmatpush1.xpose.msra.mxu0 0.0
      %999 = vmatprep.subr.mxu0 0.0
      %1000 = vmatpush1.xpose.msra.mxu0 0.0
      %1001 = vmatprep.subr.mxu0 0.0
      %1002 = vmatpush1.xpose.msra.mxu0 0.0
      %1003 = vmatprep.subr.mxu0 0.0
      %1004 = vmatpush1.xpose.msra.mxu0 0.0
      %1005 = vmatprep.subr.mxu0 0.0
      %1006 = vmatpush1.xpose.msra.mxu0 0.0
      %1007 = vmatprep.subr.mxu0 0.0
      %1008 = vmatpush1.xpose.msra.mxu0 0.0
      %1009 = vmatprep.subr.mxu0 0.0
      %1010 = vmatpush1.xpose.msra.mxu0 0.0
      %1011 = vmatprep.subr.mxu0 0.0
      %1012 = vmatpush1.xpose.msra.mxu0 0.0
      %1013 = vmatprep.subr.mxu0 0.0
      %1014 = vmatpush1.xpose.msra.mxu0 0.0
      %1015 = vmatprep.subr.mxu0 0.0
      %1016 = vmatpush1.xpose.msra.mxu0 0.0
      %1017 = vmatprep.subr.mxu0 0.0
      %1018 = vmatpush1.xpose.msra.mxu0 0.0
      %1019 = vmatprep.subr.mxu0 0.0
      %1020 = vmatpush1.xpose.msra.mxu0 0.0
      %1021 = vmatprep.subr.mxu0 0.0
      %1022 = vmatpush1.xpose.msra.mxu0 0.0
      %1023 = vmatprep.subr.mxu0 0.0
      %1024 = vmatpush1.xpose.msra.mxu0 0.0
      %1025 = vmatprep.subr.mxu0 0.0
      %1026 = vmatpush1.xpose.msra.mxu0 0.0
      %1027 = vmatprep.subr.mxu0 0.0
      %1028 = vmatpush1.xpose.msra.mxu0 0.0
      %1029 = vmatprep.subr.mxu0 0.0
      %1030 = vmatpush1.xpose.msra.mxu0 0.0
      %1031 = vmatprep.subr.mxu0 0.0
      %1032 = vmatpush1.xpose.msra.mxu0 0.0
      %1033 = vmatprep.subr.mxu0 0.0
      %1034 = vmatpush1.xpose.msra.mxu0 0.0
      %1035 = vmatprep.mubr.f32.mxu0 0.0
      %1036 = vmatmul.mubr.f32.gmra.mrb[0].mxu0 %v960
      %v1037 = vpop.f32.mrb[0].mxu0
      %v1038 = vadd.f32 0.0, %v1037
      %v1039 = vpop.f32.mrb[0].mxu0
      %1040 = vmatprep.mubr.f32.mxu0 0.0
      %1041 = vmatmul.mubr.f32.gmra.mrb[0].mxu0 %v963
      %v1042 = vpop.f32.mrb[0].mxu0
      %v1043 = vadd.f32 0.0, %v1042
      %v1044 = vpop.f32.mrb[0].mxu0
      %1045 = vdwg.mxu0
      %v1046 = vmul.f32 %v1038, 0.25
      %v1047 = vmul.f32 %v1043, 0.25
      %v1048 = vsel %vm497, %v1046, -inf
      %v1049 = vsel %vm498, %v1047, -inf
      %v1050 = vsel %vm624, %v1048, -inf
      %1051 = vmax.xlane.f32.xlu0 %v1050
      %v1052 = vpop.xlane.xlu0 %1051
      %v1053 = vsel %vm624, %v1049, -inf
      %1054 = vmax.xlane.f32.xlu0 %v1053
      %v1055 = vpop.xlane.xlu0 %1054
      %v1056 = vsub.f32 %v1048, %v1052
      %v1057 = vsub.f32 %v1049, %v1055
      %v1058 = vmul.f32 %v1056, 1.442695
      %v1059 = vpow.pop %v1058
      %v1060 = vmul.f32 %v1057, 1.442695
      %v1061 = vpow.pop %v1060
      %v1062 = vsel %vm624, %v1059, 0.0
      %1063 = vadd.xlane.f32.xlu0 %v1062
      %v1064 = vpop.xlane.xlu0 %1063
      %v1065 = vsel %vm624, %v1061, 0.0
      %1066 = vadd.xlane.f32.xlu0 %v1065
      %v1067 = vpop.xlane.xlu0 %1066
      %v1068 = vrcp.pop %v1064
      %v1069 = vmul.f32 %v1059, %v1068
      %v1070 = vrcp.pop %v1067
      %v1071 = vmul.f32 %v1061, %v1070
      %1074 = vrot.lane.b32.xlu0 %v480, 112
      %v1075 = vpop.permute.xlu0 %1074
      %1076 = vrot.lane.b32.xlu0 %v486, 112
      %v1077 = vpop.permute.xlu0 %1076
      %v1081 = vsel %vm624, %v1069, 0
      %v1084 = vsel %vm624, %v1071, 0
      %1086 = vmatprep.subr.mxu0 0.0
      %1087 = vmatpush1.msra.mxu0 %v1075
      %1088 = vmatprep.subr.mxu0 0.0
      %1089 = vmatpush1.msra.mxu0 %v1077
      %1090 = vmatprep.subr.mxu0 0.0
      %1091 = vmatpush1.msra.mxu0 0.0
      %1092 = vmatprep.subr.mxu0 0.0
      %1093 = vmatpush1.msra.mxu0 0.0
      %1094 = vmatprep.subr.mxu0 0.0
      %1095 = vmatpush1.msra.mxu0 0.0
      %1096 = vmatprep.subr.mxu0 0.0
      %1097 = vmatpush1.msra.mxu0 0.0
      %1098 = vmatprep.subr.mxu0 0.0
      %1099 = vmatpush1.msra.mxu0 0.0
      %1100 = vmatprep.subr.mxu0 0.0
      %1101 = vmatpush1.msra.mxu0 0.0
      %1102 = vmatprep.subr.mxu0 0.0
      %1103 = vmatpush1.msra.mxu0 0.0
      %1104 = vmatprep.subr.mxu0 0.0
      %1105 = vmatpush1.msra.mxu0 0.0
      %1106 = vmatprep.subr.mxu0 0.0
      %1107 = vmatpush1.msra.mxu0 0.0
      %1108 = vmatprep.subr.mxu0 0.0
      %1109 = vmatpush1.msra.mxu0 0.0
      %1110 = vmatprep.subr.mxu0 0.0
      %1111 = vmatpush1.msra.mxu0 0.0
      %1112 = vmatprep.subr.mxu0 0.0
      %1113 = vmatpush1.msra.mxu0 0.0
      %1114 = vmatprep.subr.mxu0 0.0
      %1115 = vmatpush1.msra.mxu0 0.0
      %1116 = vmatprep.subr.mxu0 0.0
      %1117 = vmatpush1.msra.mxu0 0.0
      %1118 = vmatprep.subr.mxu0 0.0
      %1119 = vmatpush1.msra.mxu0 0.0
      %1120 = vmatprep.subr.mxu0 0.0
      %1121 = vmatpush1.msra.mxu0 0.0
      %1122 = vmatprep.subr.mxu0 0.0
      %1123 = vmatpush1.msra.mxu0 0.0
      %1124 = vmatprep.subr.mxu0 0.0
      %1125 = vmatpush1.msra.mxu0 0.0
      %1126 = vmatprep.subr.mxu0 0.0
      %1127 = vmatpush1.msra.mxu0 0.0
      %1128 = vmatprep.subr.mxu0 0.0
      %1129 = vmatpush1.msra.mxu0 0.0
      %1130 = vmatprep.subr.mxu0 0.0
      %1131 = vmatpush1.msra.mxu0 0.0
      %1132 = vmatprep.subr.mxu0 0.0
      %1133 = vmatpush1.msra.mxu0 0.0
      %1134 = vmatprep.subr.mxu0 0.0
      %1135 = vmatpush1.msra.mxu0 0.0
      %1136 = vmatprep.subr.mxu0 0.0
      %1137 = vmatpush1.msra.mxu0 0.0
      %1138 = vmatprep.subr.mxu0 0.0
      %1139 = vmatpush1.msra.mxu0 0.0
      %1140 = vmatprep.subr.mxu0 0.0
      %1141 = vmatpush1.msra.mxu0 0.0
      %1142 = vmatprep.subr.mxu0 0.0
      %1143 = vmatpush1.msra.mxu0 0.0
      %1144 = vmatprep.subr.mxu0 0.0
      %1145 = vmatpush1.msra.mxu0 0.0
      %1146 = vmatprep.subr.mxu0 0.0
      %1147 = vmatpush1.msra.mxu0 0.0
      %1148 = vmatprep.subr.mxu0 0.0
      %1149 = vmatpush1.msra.mxu0 0.0
      %1150 = vmatprep.mubr.f32.mxu0 0.0
      %1151 = vmatmul.mubr.f32.gmra.mrb[0].mxu0 %v1081
      %v1152 = vpop.f32.mrb[0].mxu0
      %v1153 = vadd.f32 0.0, %v1152
      %v1154 = vpop.f32.mrb[0].mxu0
      %1155 = vmatprep.mubr.f32.mxu0 0.0
      %1156 = vmatmul.mubr.f32.gmra.mrb[0].mxu0 %v1084
      %v1157 = vpop.f32.mrb[0].mxu0
      %v1158 = vadd.f32 0.0, %v1157
      %v1159 = vpop.f32.mrb[0].mxu0
      %1160 = vdwg.mxu0
      %1161 = vrot.lane.b32.xlu0 %v488, 32
      %v1162 = vpop.permute.xlu0 %1161
      %1163 = vrot.lane.b32.xlu0 %v489, 32
      %v1164 = vpop.permute.xlu0 %1163
      %v1167 = vmul.f32 %v478, %v1162
      %v1168 = vmul.f32 %v484, %v1164
      %1169 = vrot.lane.b32.xlu0 %v490, 40
      %v1170 = vpop.permute.xlu0 %1169
      %1171 = vrot.lane.b32.xlu0 %v491, 40
      %v1172 = vpop.permute.xlu0 %1171
      %v1175 = vmul.f32 %v478, %v1170
      %v1176 = vmul.f32 %v484, %v1172
      %1179 = vrot.lane.b32.xlu0 %v1175, 120
      %v1180 = vpop.permute.xlu0 %1179
      %1181 = vrot.lane.b32.xlu0 %v1176, 120
      %v1182 = vpop.permute.xlu0 %1181
      %v1185 = vsub.f32 %v1167, %v1180
      %v1186 = vsub.f32 %v1168, %v1182
      %1187 = vrot.lane.b32.xlu0 %v490, 32
      %v1188 = vpop.permute.xlu0 %1187
      %1189 = vrot.lane.b32.xlu0 %v491, 32
      %v1190 = vpop.permute.xlu0 %1189
      %v1193 = vmul.f32 %v478, %v1188
      %v1194 = vmul.f32 %v484, %v1190
      %1195 = vrot.lane.b32.xlu0 %v488, 40
      %v1196 = vpop.permute.xlu0 %1195
      %1197 = vrot.lane.b32.xlu0 %v489, 40
      %v1198 = vpop.permute.xlu0 %1197
      %v1201 = vmul.f32 %v478, %v1196
      %v1202 = vmul.f32 %v484, %v1198
      %1205 = vrot.lane.b32.xlu0 %v1201, 120
      %v1206 = vpop.permute.xlu0 %1205
      %1207 = vrot.lane.b32.xlu0 %v1202, 120
      %v1208 = vpop.permute.xlu0 %1207
      %v1211 = vadd.f32 %v1193, %v1206
      %v1212 = vadd.f32 %v1194, %v1208
      %1215 = vrot.lane.b32.xlu0 %v1185, 96
      %v1216 = vpop.permute.xlu0 %1215
      %1217 = vrot.lane.b32.xlu0 %v1186, 96
      %v1218 = vpop.permute.xlu0 %1217
      %1223 = vrot.lane.b32.xlu0 %v1211, 104
      %v1224 = vpop.permute.xlu0 %1223
      %1225 = vrot.lane.b32.xlu0 %v1212, 104
      %v1226 = vpop.permute.xlu0 %1225
      %v1229 = vsel %vm551, %v1216, %v1224
      %v1230 = vsel %vm551, %v1218, %v1226
      %1231 = vrot.lane.b32.xlu0 %v488, 96
      %v1232 = vpop.permute.xlu0 %1231
      %1233 = vrot.lane.b32.xlu0 %v489, 96
      %v1234 = vpop.permute.xlu0 %1233
      %v1237 = vmul.f32 %v478, %v1232
      %v1238 = vmul.f32 %v484, %v1234
      %1239 = vrot.lane.b32.xlu0 %v490, 104
      %v1240 = vpop.permute.xlu0 %1239
      %1241 = vrot.lane.b32.xlu0 %v491, 104
      %v1242 = vpop.permute.xlu0 %1241
      %v1245 = vmul.f32 %v478, %v1240
      %v1246 = vmul.f32 %v484, %v1242
      %1249 = vrot.lane.b32.xlu0 %v1245, 120
      %v1250 = vpop.permute.xlu0 %1249
      %1251 = vrot.lane.b32.xlu0 %v1246, 120
      %v1252 = vpop.permute.xlu0 %1251
      %v1255 = vsub.f32 %v1237, %v1250
      %v1256 = vsub.f32 %v1238, %v1252
      %1257 = vrot.lane.b32.xlu0 %v490, 96
      %v1258 = vpop.permute.xlu0 %1257
      %1259 = vrot.lane.b32.xlu0 %v491, 96
      %v1260 = vpop.permute.xlu0 %1259
      %v1263 = vmul.f32 %v478, %v1258
      %v1264 = vmul.f32 %v484, %v1260
      %1265 = vrot.lane.b32.xlu0 %v488, 104
      %v1266 = vpop.permute.xlu0 %1265
      %1267 = vrot.lane.b32.xlu0 %v489, 104
      %v1268 = vpop.permute.xlu0 %1267
      %v1271 = vmul.f32 %v478, %v1266
      %v1272 = vmul.f32 %v484, %v1268
      %1275 = vrot.lane.b32.xlu0 %v1271, 120
      %v1276 = vpop.permute.xlu0 %1275
      %1277 = vrot.lane.b32.xlu0 %v1272, 120
      %v1278 = vpop.permute.xlu0 %1277
      %v1281 = vadd.f32 %v1263, %v1276
      %v1282 = vadd.f32 %v1264, %v1278
      %1285 = vrot.lane.b32.xlu0 %v1255, 32
      %v1286 = vpop.permute.xlu0 %1285
      %1287 = vrot.lane.b32.xlu0 %v1256, 32
      %v1288 = vpop.permute.xlu0 %1287
      %1293 = vrot.lane.b32.xlu0 %v1281, 40
      %v1294 = vpop.permute.xlu0 %1293
      %1295 = vrot.lane.b32.xlu0 %v1282, 40
      %v1296 = vpop.permute.xlu0 %1295
      %v1299 = vsel %vm551, %v1286, %v1294
      %v1300 = vsel %vm551, %v1288, %v1296
      %v1302 = vsel %vm624, %v1229, 0
      %v1305 = vsel %vm624, %v1230, 0
      %v1308 = vsel %vm624, %v1299, 0
      %v1311 = vsel %vm624, %v1300, 0
      %1313 = vmatprep.subr.mxu0 0.0
      %1314 = vmatpush1.xpose.msra.mxu0 %v1308
      %1315 = vmatprep.subr.mxu0 0.0
      %1316 = vmatpush1.xpose.msra.mxu0 %v1311
      %1317 = vmatprep.subr.mxu0 0.0
      %1318 = vmatpush1.xpose.msra.mxu0 0.0
      %1319 = vmatprep.subr.mxu0 0.0
      %1320 = vmatpush1.xpose.msra.mxu0 0.0
      %1321 = vmatprep.subr.mxu0 0.0
      %1322 = vmatpush1.xpose.msra.mxu0 0.0
      %1323 = vmatprep.subr.mxu0 0.0
      %1324 = vmatpush1.xpose.msra.mxu0 0.0
      %1325 = vmatprep.subr.mxu0 0.0
      %1326 = vmatpush1.xpose.msra.mxu0 0.0
      %1327 = vmatprep.subr.mxu0 0.0
      %1328 = vmatpush1.xpose.msra.mxu0 0.0
      %1329 = vmatprep.subr.mxu0 0.0
      %1330 = vmatpush1.xpose.msra.mxu0 0.0
      %1331 = vmatprep.subr.mxu0 0.0
      %1332 = vmatpush1.xpose.msra.mxu0 0.0
      %1333 = vmatprep.subr.mxu0 0.0
      %1334 = vmatpush1.xpose.msra.mxu0 0.0
      %1335 = vmatprep.subr.mxu0 0.0
      %1336 = vmatpush1.xpose.msra.mxu0 0.0
      %1337 = vmatprep.subr.mxu0 0.0
      %1338 = vmatpush1.xpose.msra.mxu0 0.0
      %1339 = vmatprep.subr.mxu0 0.0
      %1340 = vmatpush1.xpose.msra.mxu0 0.0
      %1341 = vmatprep.subr.mxu0 0.0
      %1342 = vmatpush1.xpose.msra.mxu0 0.0
      %1343 = vmatprep.subr.mxu0 0.0
      %1344 = vmatpush1.xpose.msra.mxu0 0.0
      %1345 = vmatprep.subr.mxu0 0.0
      %1346 = vmatpush1.xpose.msra.mxu0 0.0
      %1347 = vmatprep.subr.mxu0 0.0
      %1348 = vmatpush1.xpose.msra.mxu0 0.0
      %1349 = vmatprep.subr.mxu0 0.0
      %1350 = vmatpush1.xpose.msra.mxu0 0.0
      %1351 = vmatprep.subr.mxu0 0.0
      %1352 = vmatpush1.xpose.msra.mxu0 0.0
      %1353 = vmatprep.subr.mxu0 0.0
      %1354 = vmatpush1.xpose.msra.mxu0 0.0
      %1355 = vmatprep.subr.mxu0 0.0
      %1356 = vmatpush1.xpose.msra.mxu0 0.0
      %1357 = vmatprep.subr.mxu0 0.0
      %1358 = vmatpush1.xpose.msra.mxu0 0.0
      %1359 = vmatprep.subr.mxu0 0.0
      %1360 = vmatpush1.xpose.msra.mxu0 0.0
      %1361 = vmatprep.subr.mxu0 0.0
      %1362 = vmatpush1.xpose.msra.mxu0 0.0
      %1363 = vmatprep.subr.mxu0 0.0
      %1364 = vmatpush1.xpose.msra.mxu0 0.0
      %1365 = vmatprep.subr.mxu0 0.0
      %1366 = vmatpush1.xpose.msra.mxu0 0.0
      %1367 = vmatprep.subr.mxu0 0.0
      %1368 = vmatpush1.xpose.msra.mxu0 0.0
      %1369 = vmatprep.subr.mxu0 0.0
      %1370 = vmatpush1.xpose.msra.mxu0 0.0
      %1371 = vmatprep.subr.mxu0 0.0
      %1372 = vmatpush1.xpose.msra.mxu0 0.0
      %1373 = vmatprep.subr.mxu0 0.0
      %1374 = vmatpush1.xpose.msra.mxu0 0.0
      %1375 = vmatprep.subr.mxu0 0.0
      %1376 = vmatpush1.xpose.msra.mxu0 0.0
      %1377 = vmatprep.mubr.f32.mxu0 0.0
      %1378 = vmatmul.mubr.f32.gmra.mrb[0].mxu0 %v1302
      %v1379 = vpop.f32.mrb[0].mxu0
      %v1380 = vadd.f32 0.0, %v1379
      %v1381 = vpop.f32.mrb[0].mxu0
      %1382 = vmatprep.mubr.f32.mxu0 0.0
      %1383 = vmatmul.mubr.f32.gmra.mrb[0].mxu0 %v1305
      %v1384 = vpop.f32.mrb[0].mxu0
      %v1385 = vadd.f32 0.0, %v1384
      %v1386 = vpop.f32.mrb[0].mxu0
      %1387 = vdwg.mxu0
      %v1388 = vmul.f32 %v1380, 0.25
      %v1389 = vmul.f32 %v1385, 0.25
      %v1390 = vsel %vm497, %v1388, -inf
      %v1391 = vsel %vm498, %v1389, -inf
      %v1392 = vsel %vm624, %v1390, -inf
      %1393 = vmax.xlane.f32.xlu0 %v1392
      %v1394 = vpop.xlane.xlu0 %1393
      %v1395 = vsel %vm624, %v1391, -inf
      %1396 = vmax.xlane.f32.xlu0 %v1395
      %v1397 = vpop.xlane.xlu0 %1396
      %v1398 = vsub.f32 %v1390, %v1394
      %v1399 = vsub.f32 %v1391, %v1397
      %v1400 = vmul.f32 %v1398, 1.442695
      %v1401 = vpow.pop %v1400
      %v1402 = vmul.f32 %v1399, 1.442695
      %v1403 = vpow.pop %v1402
      %v1404 = vsel %vm624, %v1401, 0.0
      %1405 = vadd.xlane.f32.xlu0 %v1404
      %v1406 = vpop.xlane.xlu0 %1405
      %v1407 = vsel %vm624, %v1403, 0.0
      %1408 = vadd.xlane.f32.xlu0 %v1407
      %v1409 = vpop.xlane.xlu0 %1408
      %v1410 = vrcp.pop %v1406
      %v1411 = vmul.f32 %v1401, %v1410
      %v1412 = vrcp.pop %v1409
      %v1413 = vmul.f32 %v1403, %v1412
      %1414 = vrot.lane.b32.xlu0 %v480, 96
      %v1415 = vpop.permute.xlu0 %1414
      %1416 = vrot.lane.b32.xlu0 %v486, 96
      %v1417 = vpop.permute.xlu0 %1416
      %v1421 = vsel %vm624, %v1411, 0
      %v1424 = vsel %vm624, %v1413, 0
      %1426 = vmatprep.subr.mxu0 0.0
      %1427 = vmatpush1.msra.mxu0 %v1415
      %1428 = vmatprep.subr.mxu0 0.0
      %1429 = vmatpush1.msra.mxu0 %v1417
      %1430 = vmatprep.subr.mxu0 0.0
      %1431 = vmatpush1.msra.mxu0 0.0
      %1432 = vmatprep.subr.mxu0 0.0
      %1433 = vmatpush1.msra.mxu0 0.0
      %1434 = vmatprep.subr.mxu0 0.0
      %1435 = vmatpush1.msra.mxu0 0.0
      %1436 = vmatprep.subr.mxu0 0.0
      %1437 = vmatpush1.msra.mxu0 0.0
      %1438 = vmatprep.subr.mxu0 0.0
      %1439 = vmatpush1.msra.mxu0 0.0
      %1440 = vmatprep.subr.mxu0 0.0
      %1441 = vmatpush1.msra.mxu0 0.0
      %1442 = vmatprep.subr.mxu0 0.0
      %1443 = vmatpush1.msra.mxu0 0.0
      %1444 = vmatprep.subr.mxu0 0.0
      %1445 = vmatpush1.msra.mxu0 0.0
      %1446 = vmatprep.subr.mxu0 0.0
      %1447 = vmatpush1.msra.mxu0 0.0
      %1448 = vmatprep.subr.mxu0 0.0
      %1449 = vmatpush1.msra.mxu0 0.0
      %1450 = vmatprep.subr.mxu0 0.0
      %1451 = vmatpush1.msra.mxu0 0.0
      %1452 = vmatprep.subr.mxu0 0.0
      %1453 = vmatpush1.msra.mxu0 0.0
      %1454 = vmatprep.subr.mxu0 0.0
      %1455 = vmatpush1.msra.mxu0 0.0
      %1456 = vmatprep.subr.mxu0 0.0
      %1457 = vmatpush1.msra.mxu0 0.0
      %1458 = vmatprep.subr.mxu0 0.0
      %1459 = vmatpush1.msra.mxu0 0.0
      %1460 = vmatprep.subr.mxu0 0.0
      %1461 = vmatpush1.msra.mxu0 0.0
      %1462 = vmatprep.subr.mxu0 0.0
      %1463 = vmatpush1.msra.mxu0 0.0
      %1464 = vmatprep.subr.mxu0 0.0
      %1465 = vmatpush1.msra.mxu0 0.0
      %1466 = vmatprep.subr.mxu0 0.0
      %1467 = vmatpush1.msra.mxu0 0.0
      %1468 = vmatprep.subr.mxu0 0.0
      %1469 = vmatpush1.msra.mxu0 0.0
      %1470 = vmatprep.subr.mxu0 0.0
      %1471 = vmatpush1.msra.mxu0 0.0
      %1472 = vmatprep.subr.mxu0 0.0
      %1473 = vmatpush1.msra.mxu0 0.0
      %1474 = vmatprep.subr.mxu0 0.0
      %1475 = vmatpush1.msra.mxu0 0.0
      %1476 = vmatprep.subr.mxu0 0.0
      %1477 = vmatpush1.msra.mxu0 0.0
      %1478 = vmatprep.subr.mxu0 0.0
      %1479 = vmatpush1.msra.mxu0 0.0
      %1480 = vmatprep.subr.mxu0 0.0
      %1481 = vmatpush1.msra.mxu0 0.0
      %1482 = vmatprep.subr.mxu0 0.0
      %1483 = vmatpush1.msra.mxu0 0.0
      %1484 = vmatprep.subr.mxu0 0.0
      %1485 = vmatpush1.msra.mxu0 0.0
      %1486 = vmatprep.subr.mxu0 0.0
      %1487 = vmatpush1.msra.mxu0 0.0
      %1488 = vmatprep.subr.mxu0 0.0
      %1489 = vmatpush1.msra.mxu0 0.0
      %1490 = vmatprep.mubr.f32.mxu0 0.0
      %1491 = vmatmul.mubr.f32.gmra.mrb[0].mxu0 %v1421
      %v1492 = vpop.f32.mrb[0].mxu0
      %v1493 = vadd.f32 0.0, %v1492
      %v1494 = vpop.f32.mrb[0].mxu0
      %1495 = vmatprep.mubr.f32.mxu0 0.0
      %1496 = vmatmul.mubr.f32.gmra.mrb[0].mxu0 %v1424
      %v1497 = vpop.f32.mrb[0].mxu0
      %v1498 = vadd.f32 0.0, %v1497
      %v1499 = vpop.f32.mrb[0].mxu0
      %1500 = vdwg.mxu0
      %1501 = vrot.lane.b32.xlu0 %v488, 48
      %v1502 = vpop.permute.xlu0 %1501
      %1503 = vrot.lane.b32.xlu0 %v489, 48
      %v1504 = vpop.permute.xlu0 %1503
      %v1507 = vmul.f32 %v478, %v1502
      %v1508 = vmul.f32 %v484, %v1504
      %1509 = vrot.lane.b32.xlu0 %v490, 56
      %v1510 = vpop.permute.xlu0 %1509
      %1511 = vrot.lane.b32.xlu0 %v491, 56
      %v1512 = vpop.permute.xlu0 %1511
      %v1515 = vmul.f32 %v478, %v1510
      %v1516 = vmul.f32 %v484, %v1512
      %1519 = vrot.lane.b32.xlu0 %v1515, 120
      %v1520 = vpop.permute.xlu0 %1519
      %1521 = vrot.lane.b32.xlu0 %v1516, 120
      %v1522 = vpop.permute.xlu0 %1521
      %v1525 = vsub.f32 %v1507, %v1520
      %v1526 = vsub.f32 %v1508, %v1522
      %1527 = vrot.lane.b32.xlu0 %v490, 48
      %v1528 = vpop.permute.xlu0 %1527
      %1529 = vrot.lane.b32.xlu0 %v491, 48
      %v1530 = vpop.permute.xlu0 %1529
      %v1533 = vmul.f32 %v478, %v1528
      %v1534 = vmul.f32 %v484, %v1530
      %1535 = vrot.lane.b32.xlu0 %v488, 56
      %v1536 = vpop.permute.xlu0 %1535
      %1537 = vrot.lane.b32.xlu0 %v489, 56
      %v1538 = vpop.permute.xlu0 %1537
      %v1541 = vmul.f32 %v478, %v1536
      %v1542 = vmul.f32 %v484, %v1538
      %1545 = vrot.lane.b32.xlu0 %v1541, 120
      %v1546 = vpop.permute.xlu0 %1545
      %1547 = vrot.lane.b32.xlu0 %v1542, 120
      %v1548 = vpop.permute.xlu0 %1547
      %v1551 = vadd.f32 %v1533, %v1546
      %v1552 = vadd.f32 %v1534, %v1548
      %1555 = vrot.lane.b32.xlu0 %v1525, 80
      %v1556 = vpop.permute.xlu0 %1555
      %1557 = vrot.lane.b32.xlu0 %v1526, 80
      %v1558 = vpop.permute.xlu0 %1557
      %1563 = vrot.lane.b32.xlu0 %v1551, 88
      %v1564 = vpop.permute.xlu0 %1563
      %1565 = vrot.lane.b32.xlu0 %v1552, 88
      %v1566 = vpop.permute.xlu0 %1565
      %v1569 = vsel %vm551, %v1556, %v1564
      %v1570 = vsel %vm551, %v1558, %v1566
      %1571 = vrot.lane.b32.xlu0 %v488, 112
      %v1572 = vpop.permute.xlu0 %1571
      %1573 = vrot.lane.b32.xlu0 %v489, 112
      %v1574 = vpop.permute.xlu0 %1573
      %v1577 = vmul.f32 %v478, %v1572
      %v1578 = vmul.f32 %v484, %v1574
      %1579 = vrot.lane.b32.xlu0 %v490, 120
      %v1580 = vpop.permute.xlu0 %1579
      %1581 = vrot.lane.b32.xlu0 %v491, 120
      %v1582 = vpop.permute.xlu0 %1581
      %v1585 = vmul.f32 %v478, %v1580
      %v1586 = vmul.f32 %v484, %v1582
      %1589 = vrot.lane.b32.xlu0 %v1585, 120
      %v1590 = vpop.permute.xlu0 %1589
      %1591 = vrot.lane.b32.xlu0 %v1586, 120
      %v1592 = vpop.permute.xlu0 %1591
      %v1595 = vsub.f32 %v1577, %v1590
      %v1596 = vsub.f32 %v1578, %v1592
      %1597 = vrot.lane.b32.xlu0 %v490, 112
      %v1598 = vpop.permute.xlu0 %1597
      %1599 = vrot.lane.b32.xlu0 %v491, 112
      %v1600 = vpop.permute.xlu0 %1599
      %v1603 = vmul.f32 %v478, %v1598
      %v1604 = vmul.f32 %v484, %v1600
      %1605 = vrot.lane.b32.xlu0 %v488, 120
      %v1606 = vpop.permute.xlu0 %1605
      %1607 = vrot.lane.b32.xlu0 %v489, 120
      %v1608 = vpop.permute.xlu0 %1607
      %v1611 = vmul.f32 %v478, %v1606
      %v1612 = vmul.f32 %v484, %v1608
      %1615 = vrot.lane.b32.xlu0 %v1611, 120
      %v1616 = vpop.permute.xlu0 %1615
      %1617 = vrot.lane.b32.xlu0 %v1612, 120
      %v1618 = vpop.permute.xlu0 %1617
      %v1621 = vadd.f32 %v1603, %v1616
      %v1622 = vadd.f32 %v1604, %v1618
      %1625 = vrot.lane.b32.xlu0 %v1595, 16
      %v1626 = vpop.permute.xlu0 %1625
      %1627 = vrot.lane.b32.xlu0 %v1596, 16
      %v1628 = vpop.permute.xlu0 %1627
      %1633 = vrot.lane.b32.xlu0 %v1621, 24
      %v1634 = vpop.permute.xlu0 %1633
      %1635 = vrot.lane.b32.xlu0 %v1622, 24
      %v1636 = vpop.permute.xlu0 %1635
      %v1639 = vsel %vm551, %v1626, %v1634
      %v1640 = vsel %vm551, %v1628, %v1636
      %v1642 = vsel %vm624, %v1569, 0
      %v1645 = vsel %vm624, %v1570, 0
      %v1648 = vsel %vm624, %v1639, 0
      %v1651 = vsel %vm624, %v1640, 0
      %1653 = vmatprep.subr.mxu0 0.0
      %1654 = vmatpush1.xpose.msra.mxu0 %v1648
      %1655 = vmatprep.subr.mxu0 0.0
      %1656 = vmatpush1.xpose.msra.mxu0 %v1651
      %1657 = vmatprep.subr.mxu0 0.0
      %1658 = vmatpush1.xpose.msra.mxu0 0.0
      %1659 = vmatprep.subr.mxu0 0.0
      %1660 = vmatpush1.xpose.msra.mxu0 0.0
      %1661 = vmatprep.subr.mxu0 0.0
      %1662 = vmatpush1.xpose.msra.mxu0 0.0
      %1663 = vmatprep.subr.mxu0 0.0
      %1664 = vmatpush1.xpose.msra.mxu0 0.0
      %1665 = vmatprep.subr.mxu0 0.0
      %1666 = vmatpush1.xpose.msra.mxu0 0.0
      %1667 = vmatprep.subr.mxu0 0.0
      %1668 = vmatpush1.xpose.msra.mxu0 0.0
      %1669 = vmatprep.subr.mxu0 0.0
      %1670 = vmatpush1.xpose.msra.mxu0 0.0
      %1671 = vmatprep.subr.mxu0 0.0
      %1672 = vmatpush1.xpose.msra.mxu0 0.0
      %1673 = vmatprep.subr.mxu0 0.0
      %1674 = vmatpush1.xpose.msra.mxu0 0.0
      %1675 = vmatprep.subr.mxu0 0.0
      %1676 = vmatpush1.xpose.msra.mxu0 0.0
      %1677 = vmatprep.subr.mxu0 0.0
      %1678 = vmatpush1.xpose.msra.mxu0 0.0
      %1679 = vmatprep.subr.mxu0 0.0
      %1680 = vmatpush1.xpose.msra.mxu0 0.0
      %1681 = vmatprep.subr.mxu0 0.0
      %1682 = vmatpush1.xpose.msra.mxu0 0.0
      %1683 = vmatprep.subr.mxu0 0.0
      %1684 = vmatpush1.xpose.msra.mxu0 0.0
      %1685 = vmatprep.subr.mxu0 0.0
      %1686 = vmatpush1.xpose.msra.mxu0 0.0
      %1687 = vmatprep.subr.mxu0 0.0
      %1688 = vmatpush1.xpose.msra.mxu0 0.0
      %1689 = vmatprep.subr.mxu0 0.0
      %1690 = vmatpush1.xpose.msra.mxu0 0.0
      %1691 = vmatprep.subr.mxu0 0.0
      %1692 = vmatpush1.xpose.msra.mxu0 0.0
      %1693 = vmatprep.subr.mxu0 0.0
      %1694 = vmatpush1.xpose.msra.mxu0 0.0
      %1695 = vmatprep.subr.mxu0 0.0
      %1696 = vmatpush1.xpose.msra.mxu0 0.0
      %1697 = vmatprep.subr.mxu0 0.0
      %1698 = vmatpush1.xpose.msra.mxu0 0.0
      %1699 = vmatprep.subr.mxu0 0.0
      %1700 = vmatpush1.xpose.msra.mxu0 0.0
      %1701 = vmatprep.subr.mxu0 0.0
      %1702 = vmatpush1.xpose.msra.mxu0 0.0
      %1703 = vmatprep.subr.mxu0 0.0
      %1704 = vmatpush1.xpose.msra.mxu0 0.0
      %1705 = vmatprep.subr.mxu0 0.0
      %1706 = vmatpush1.xpose.msra.mxu0 0.0
      %1707 = vmatprep.subr.mxu0 0.0
      %1708 = vmatpush1.xpose.msra.mxu0 0.0
      %1709 = vmatprep.subr.mxu0 0.0
      %1710 = vmatpush1.xpose.msra.mxu0 0.0
      %1711 = vmatprep.subr.mxu0 0.0
      %1712 = vmatpush1.xpose.msra.mxu0 0.0
      %1713 = vmatprep.subr.mxu0 0.0
      %1714 = vmatpush1.xpose.msra.mxu0 0.0
      %1715 = vmatprep.subr.mxu0 0.0
      %1716 = vmatpush1.xpose.msra.mxu0 0.0
      %1717 = vmatprep.mubr.f32.mxu0 0.0
      %1718 = vmatmul.mubr.f32.gmra.mrb[0].mxu0 %v1642
      %v1719 = vpop.f32.mrb[0].mxu0
      %v1720 = vadd.f32 0.0, %v1719
      %v1721 = vpop.f32.mrb[0].mxu0
      %1722 = vmatprep.mubr.f32.mxu0 0.0
      %1723 = vmatmul.mubr.f32.gmra.mrb[0].mxu0 %v1645
      %v1724 = vpop.f32.mrb[0].mxu0
      %v1725 = vadd.f32 0.0, %v1724
      %v1726 = vpop.f32.mrb[0].mxu0
      %1727 = vdwg.mxu0
      %v1728 = vmul.f32 %v1720, 0.25
      %v1729 = vmul.f32 %v1725, 0.25
      %v1730 = vsel %vm497, %v1728, -inf
      %v1731 = vsel %vm498, %v1729, -inf
      %v1732 = vsel %vm624, %v1730, -inf
      %1733 = vmax.xlane.f32.xlu0 %v1732
      %v1734 = vpop.xlane.xlu0 %1733
      %v1735 = vsel %vm624, %v1731, -inf
      %1736 = vmax.xlane.f32.xlu0 %v1735
      %v1737 = vpop.xlane.xlu0 %1736
      %v1738 = vsub.f32 %v1730, %v1734
      %v1739 = vsub.f32 %v1731, %v1737
      %v1740 = vmul.f32 %v1738, 1.442695
      %v1741 = vpow.pop %v1740
      %v1742 = vmul.f32 %v1739, 1.442695
      %v1743 = vpow.pop %v1742
      %v1744 = vsel %vm624, %v1741, 0.0
      %1745 = vadd.xlane.f32.xlu0 %v1744
      %v1746 = vpop.xlane.xlu0 %1745
      %v1747 = vsel %vm624, %v1743, 0.0
      %1748 = vadd.xlane.f32.xlu0 %v1747
      %v1749 = vpop.xlane.xlu0 %1748
      %v1750 = vrcp.pop %v1746
      %v1751 = vmul.f32 %v1741, %v1750
      %v1752 = vrcp.pop %v1749
      %v1753 = vmul.f32 %v1743, %v1752
      %1754 = vrot.lane.b32.xlu0 %v480, 80
      %v1755 = vpop.permute.xlu0 %1754
      %1756 = vrot.lane.b32.xlu0 %v486, 80
      %v1757 = vpop.permute.xlu0 %1756
      %v1761 = vsel %vm624, %v1751, 0
      %v1764 = vsel %vm624, %v1753, 0
      %1766 = vmatprep.subr.mxu0 0.0
      %1767 = vmatpush1.msra.mxu0 %v1755
      %1768 = vmatprep.subr.mxu0 0.0
      %1769 = vmatpush1.msra.mxu0 %v1757
      %1770 = vmatprep.subr.mxu0 0.0
      %1771 = vmatpush1.msra.mxu0 0.0
      %1772 = vmatprep.subr.mxu0 0.0
      %1773 = vmatpush1.msra.mxu0 0.0
      %1774 = vmatprep.subr.mxu0 0.0
      %1775 = vmatpush1.msra.mxu0 0.0
      %1776 = vmatprep.subr.mxu0 0.0
      %1777 = vmatpush1.msra.mxu0 0.0
      %1778 = vmatprep.subr.mxu0 0.0
      %1779 = vmatpush1.msra.mxu0 0.0
      %1780 = vmatprep.subr.mxu0 0.0
      %1781 = vmatpush1.msra.mxu0 0.0
      %1782 = vmatprep.subr.mxu0 0.0
      %1783 = vmatpush1.msra.mxu0 0.0
      %1784 = vmatprep.subr.mxu0 0.0
      %1785 = vmatpush1.msra.mxu0 0.0
      %1786 = vmatprep.subr.mxu0 0.0
      %1787 = vmatpush1.msra.mxu0 0.0
      %1788 = vmatprep.subr.mxu0 0.0
      %1789 = vmatpush1.msra.mxu0 0.0
      %1790 = vmatprep.subr.mxu0 0.0
      %1791 = vmatpush1.msra.mxu0 0.0
      %1792 = vmatprep.subr.mxu0 0.0
      %1793 = vmatpush1.msra.mxu0 0.0
      %1794 = vmatprep.subr.mxu0 0.0
      %1795 = vmatpush1.msra.mxu0 0.0
      %1796 = vmatprep.subr.mxu0 0.0
      %1797 = vmatpush1.msra.mxu0 0.0
      %1798 = vmatprep.subr.mxu0 0.0
      %1799 = vmatpush1.msra.mxu0 0.0
      %1800 = vmatprep.subr.mxu0 0.0
      %1801 = vmatpush1.msra.mxu0 0.0
      %1802 = vmatprep.subr.mxu0 0.0
      %1803 = vmatpush1.msra.mxu0 0.0
      %1804 = vmatprep.subr.mxu0 0.0
      %1805 = vmatpush1.msra.mxu0 0.0
      %1806 = vmatprep.subr.mxu0 0.0
      %1807 = vmatpush1.msra.mxu0 0.0
      %1808 = vmatprep.subr.mxu0 0.0
      %1809 = vmatpush1.msra.mxu0 0.0
      %1810 = vmatprep.subr.mxu0 0.0
      %1811 = vmatpush1.msra.mxu0 0.0
      %1812 = vmatprep.subr.mxu0 0.0
      %1813 = vmatpush1.msra.mxu0 0.0
      %1814 = vmatprep.subr.mxu0 0.0
      %1815 = vmatpush1.msra.mxu0 0.0
      %1816 = vmatprep.subr.mxu0 0.0
      %1817 = vmatpush1.msra.mxu0 0.0
      %1818 = vmatprep.subr.mxu0 0.0
      %1819 = vmatpush1.msra.mxu0 0.0
      %1820 = vmatprep.subr.mxu0 0.0
      %1821 = vmatpush1.msra.mxu0 0.0
      %1822 = vmatprep.subr.mxu0 0.0
      %1823 = vmatpush1.msra.mxu0 0.0
      %1824 = vmatprep.subr.mxu0 0.0
      %1825 = vmatpush1.msra.mxu0 0.0
      %1826 = vmatprep.subr.mxu0 0.0
      %1827 = vmatpush1.msra.mxu0 0.0
      %1828 = vmatprep.subr.mxu0 0.0
      %1829 = vmatpush1.msra.mxu0 0.0
      %1830 = vmatprep.mubr.f32.mxu0 0.0
      %1831 = vmatmul.mubr.f32.gmra.mrb[0].mxu0 %v1761
      %v1832 = vpop.f32.mrb[0].mxu0
      %v1833 = vadd.f32 0.0, %v1832
      %v1834 = vpop.f32.mrb[0].mxu0
      %1835 = vmatprep.mubr.f32.mxu0 0.0
      %1836 = vmatmul.mubr.f32.gmra.mrb[0].mxu0 %v1764
      %v1837 = vpop.f32.mrb[0].mxu0
      %v1838 = vadd.f32 0.0, %v1837
      %v1839 = vpop.f32.mrb[0].mxu0
      %1840 = vdwg.mxu0
      %1843 = vrot.lane.b32.xlu0 %v1153, 16
      %v1844 = vpop.permute.xlu0 %1843
      %1845 = vrot.lane.b32.xlu0 %v1158, 16
      %v1846 = vpop.permute.xlu0 %1845
      %1851 = vrot.lane.b32.xlu0 %v1493, 32
      %v1852 = vpop.permute.xlu0 %1851
      %1853 = vrot.lane.b32.xlu0 %v1498, 32
      %v1854 = vpop.permute.xlu0 %1853
      %1859 = vrot.lane.b32.xlu0 %v1833, 48
      %v1860 = vpop.permute.xlu0 %1859
      %1861 = vrot.lane.b32.xlu0 %v1838, 48
      %v1862 = vpop.permute.xlu0 %1861
      %v1865 = vsel %vm624, %v811, %v1844
      %v1866 = vsel %vm624, %v816, %v1846
      %vm1867 = vcmask 261120
      %v1868 = vsel %vm1867, %v1865, %v1852
      %v1869 = vsel %vm1867, %v1866, %v1854
      %vm1870 = vcmask 392192
      %v1871 = vsel %vm1870, %v1868, %v1860
      %v1872 = vsel %vm1870, %v1869, %v1862
      %v1873 = vld [vmem:[%s4] sm:$0xff]
      %v1874 = vld [vmem:[%s4 + $0x8] sm:$0xff]
      %v1875 = vld [vmem:[%s4 + $0x10] sm:$0xff]
      %v1876 = vld [vmem:[%s4 + $0x18] sm:$0xff]
      %v1877 = vld [vmem:[%s4 + $0x20] sm:$0xff]
      %v1878 = vld [vmem:[%s4 + $0x28] sm:$0xff]
      %v1879 = vld [vmem:[%s4 + $0x30] sm:$0xff]
      %v1880 = vld [vmem:[%s4 + $0x38] sm:$0xff]
      %v1882 = vsel %vm364, %v1871, 0
      %v1885 = vsel %vm364, %v1872, 0
      %1887 = vmatprep.subr.mxu0 0.0
      %1888 = vmatpush1.msra.mxu0 %v1873
      %1889 = vmatprep.subr.mxu0 0.0
      %1890 = vmatpush1.msra.mxu0 %v1874
      %1891 = vmatprep.subr.mxu0 0.0
      %1892 = vmatpush1.msra.mxu0 %v1875
      %1893 = vmatprep.subr.mxu0 0.0
      %1894 = vmatpush1.msra.mxu0 %v1876
      %1895 = vmatprep.subr.mxu0 0.0
      %1896 = vmatpush1.msra.mxu0 %v1877
      %1897 = vmatprep.subr.mxu0 0.0
      %1898 = vmatpush1.msra.mxu0 %v1878
      %1899 = vmatprep.subr.mxu0 0.0
      %1900 = vmatpush1.msra.mxu0 %v1879
      %1901 = vmatprep.subr.mxu0 0.0
      %1902 = vmatpush1.msra.mxu0 %v1880
      %1903 = vmatprep.subr.mxu0 0.0
      %1904 = vmatpush1.msra.mxu0 0.0
      %1905 = vmatprep.subr.mxu0 0.0
      %1906 = vmatpush1.msra.mxu0 0.0
      %1907 = vmatprep.subr.mxu0 0.0
      %1908 = vmatpush1.msra.mxu0 0.0
      %1909 = vmatprep.subr.mxu0 0.0
      %1910 = vmatpush1.msra.mxu0 0.0
      %1911 = vmatprep.subr.mxu0 0.0
      %1912 = vmatpush1.msra.mxu0 0.0
      %1913 = vmatprep.subr.mxu0 0.0
      %1914 = vmatpush1.msra.mxu0 0.0
      %1915 = vmatprep.subr.mxu0 0.0
      %1916 = vmatpush1.msra.mxu0 0.0
      %1917 = vmatprep.subr.mxu0 0.0
      %1918 = vmatpush1.msra.mxu0 0.0
      %1919 = vmatprep.subr.mxu0 0.0
      %1920 = vmatpush1.msra.mxu0 0.0
      %1921 = vmatprep.subr.mxu0 0.0
      %1922 = vmatpush1.msra.mxu0 0.0
      %1923 = vmatprep.subr.mxu0 0.0
      %1924 = vmatpush1.msra.mxu0 0.0
      %1925 = vmatprep.subr.mxu0 0.0
      %1926 = vmatpush1.msra.mxu0 0.0
      %1927 = vmatprep.subr.mxu0 0.0
      %1928 = vmatpush1.msra.mxu0 0.0
      %1929 = vmatprep.subr.mxu0 0.0
      %1930 = vmatpush1.msra.mxu0 0.0
      %1931 = vmatprep.subr.mxu0 0.0
      %1932 = vmatpush1.msra.mxu0 0.0
      %1933 = vmatprep.subr.mxu0 0.0
      %1934 = vmatpush1.msra.mxu0 0.0
      %1935 = vmatprep.subr.mxu0 0.0
      %1936 = vmatpush1.msra.mxu0 0.0
      %1937 = vmatprep.subr.mxu0 0.0
      %1938 = vmatpush1.msra.mxu0 0.0
      %1939 = vmatprep.subr.mxu0 0.0
      %1940 = vmatpush1.msra.mxu0 0.0
      %1941 = vmatprep.subr.mxu0 0.0
      %1942 = vmatpush1.msra.mxu0 0.0
      %1943 = vmatprep.subr.mxu0 0.0
      %1944 = vmatpush1.msra.mxu0 0.0
      %1945 = vmatprep.subr.mxu0 0.0
      %1946 = vmatpush1.msra.mxu0 0.0
      %1947 = vmatprep.subr.mxu0 0.0
      %1948 = vmatpush1.msra.mxu0 0.0
      %1949 = vmatprep.subr.mxu0 0.0
      %1950 = vmatpush1.msra.mxu0 0.0
      %1951 = vmatprep.mubr.f32.mxu0 0.0
      %1952 = vmatmul.mubr.f32.gmra.mrb[0].mxu0 %v1882
      %v1953 = vpop.f32.mrb[0].mxu0
      %v1954 = vadd.f32 0.0, %v1953
      %v1955 = vpop.f32.mrb[0].mxu0
      %1956 = vmatprep.mubr.f32.mxu0 0.0
      %1957 = vmatmul.mubr.f32.gmra.mrb[0].mxu0 %v1885
      %v1958 = vpop.f32.mrb[0].mxu0
      %v1959 = vadd.f32 0.0, %v1958
      %v1960 = vpop.f32.mrb[0].mxu0
      %1961 = vdwg.mxu0
      %v1962 = vadd.f32 %v360, %v1954
      %v1963 = vadd.f32 %v361, %v1959
      %v1964 = vmul.f32 %v1962, %v1962
      %v1965 = vmul.f32 %v1963, %v1963
      %v1966 = vsel %vm364, %v1964, 0.0
      %1967 = vadd.xlane.f32.xlu0 %v1966
      %v1968 = vpop.xlane.xlu0 %1967
      %v1969 = vsel %vm364, %v1965, 0.0
      %1970 = vadd.xlane.f32.xlu0 %v1969
      %v1971 = vpop.xlane.xlu0 %1970
      %v1972 = vmul.f32 %v1968, %v371
      %v1973 = vmul.f32 %v1971, %v371
      %v1974 = vadd.f32 %v1972, 1e-06
      %v1975 = vadd.f32 %v1973, 1e-06
      %v1976 = vrsqrt.pop %v1974
      %v1977 = vrsqrt.pop %v1975
      %v1978 = vmul.f32 %v1962, %v1976
      %v1979 = vmul.f32 %v1963, %v1977
      %v1980 = vld [vmem:[%s2] sm:$0x1]
      %v1982 = vlaneseq
      %v1983 = vshrl.u32 %v1982, 7
      %v1984 = vsub.s32 0, %v1983
      %v1985 = vrot.slane %v1980, %v1984
      %v1987 = vmul.f32 %v1978, %v1985
      %v1988 = vmul.f32 %v1979, %v1985
      %v1989 = vld [vmem:[%s5] sm:$0xff]
      %v1990 = vld [vmem:[%s5 + $0x8] sm:$0xff]
      %v1991 = vld [vmem:[%s5 + $0x10] sm:$0xff]
      %v1992 = vld [vmem:[%s5 + $0x18] sm:$0xff]
      %v1993 = vld [vmem:[%s5 + $0x20] sm:$0xff]
      %v1994 = vld [vmem:[%s5 + $0x28] sm:$0xff]
      %v1995 = vld [vmem:[%s5 + $0x30] sm:$0xff]
      %v1996 = vld [vmem:[%s5 + $0x38] sm:$0xff]
      %v1997 = vld [vmem:[%s5 + $0x40] sm:$0xff]
      %v1998 = vld [vmem:[%s5 + $0x48] sm:$0xff]
      %v1999 = vld [vmem:[%s5 + $0x50] sm:$0xff]
      %v2000 = vld [vmem:[%s5 + $0x58] sm:$0xff]
      %v2001 = vld [vmem:[%s5 + $0x60] sm:$0xff]
      %v2002 = vld [vmem:[%s5 + $0x68] sm:$0xff]
      %v2003 = vld [vmem:[%s5 + $0x70] sm:$0xff]
      %v2004 = vld [vmem:[%s5 + $0x78] sm:$0xff]
      %v2006 = vsel %vm364, %v1987, 0
      %v2009 = vsel %vm364, %v1988, 0
      %2011 = vmatprep.subr.mxu0 %v1990
      %2012 = vmatpush1.msra.mxu0 %v1989
      %2013 = vmatprep.subr.mxu0 %v1992
      %2014 = vmatpush1.msra.mxu0 %v1991
      %2015 = vmatprep.subr.mxu0 %v1994
      %2016 = vmatpush1.msra.mxu0 %v1993
      %2017 = vmatprep.subr.mxu0 %v1996
      %2018 = vmatpush1.msra.mxu0 %v1995
      %2019 = vmatprep.subr.mxu0 %v1998
      %2020 = vmatpush1.msra.mxu0 %v1997
      %2021 = vmatprep.subr.mxu0 %v2000
      %2022 = vmatpush1.msra.mxu0 %v1999
      %2023 = vmatprep.subr.mxu0 %v2002
      %2024 = vmatpush1.msra.mxu0 %v2001
      %2025 = vmatprep.subr.mxu0 %v2004
      %2026 = vmatpush1.msra.mxu0 %v2003
      %2027 = vmatprep.subr.mxu0 0.0
      %2028 = vmatpush1.msra.mxu0 0.0
      %2029 = vmatprep.subr.mxu0 0.0
      %2030 = vmatpush1.msra.mxu0 0.0
      %2031 = vmatprep.subr.mxu0 0.0
      %2032 = vmatpush1.msra.mxu0 0.0
      %2033 = vmatprep.subr.mxu0 0.0
      %2034 = vmatpush1.msra.mxu0 0.0
      %2035 = vmatprep.subr.mxu0 0.0
      %2036 = vmatpush1.msra.mxu0 0.0
      %2037 = vmatprep.subr.mxu0 0.0
      %2038 = vmatpush1.msra.mxu0 0.0
      %2039 = vmatprep.subr.mxu0 0.0
      %2040 = vmatpush1.msra.mxu0 0.0
      %2041 = vmatprep.subr.mxu0 0.0
      %2042 = vmatpush1.msra.mxu0 0.0
      %2043 = vmatprep.subr.mxu0 0.0
      %2044 = vmatpush1.msra.mxu0 0.0
      %2045 = vmatprep.subr.mxu0 0.0
      %2046 = vmatpush1.msra.mxu0 0.0
      %2047 = vmatprep.subr.mxu0 0.0
      %2048 = vmatpush1.msra.mxu0 0.0
      %2049 = vmatprep.subr.mxu0 0.0
      %2050 = vmatpush1.msra.mxu0 0.0
      %2051 = vmatprep.subr.mxu0 0.0
      %2052 = vmatpush1.msra.mxu0 0.0
      %2053 = vmatprep.subr.mxu0 0.0
      %2054 = vmatpush1.msra.mxu0 0.0
      %2055 = vmatprep.subr.mxu0 0.0
      %2056 = vmatpush1.msra.mxu0 0.0
      %2057 = vmatprep.subr.mxu0 0.0
      %2058 = vmatpush1.msra.mxu0 0.0
      %2059 = vmatprep.subr.mxu0 0.0
      %2060 = vmatpush1.msra.mxu0 0.0
      %2061 = vmatprep.subr.mxu0 0.0
      %2062 = vmatpush1.msra.mxu0 0.0
      %2063 = vmatprep.subr.mxu0 0.0
      %2064 = vmatpush1.msra.mxu0 0.0
      %2065 = vmatprep.subr.mxu0 0.0
      %2066 = vmatpush1.msra.mxu0 0.0
      %2067 = vmatprep.subr.mxu0 0.0
      %2068 = vmatpush1.msra.mxu0 0.0
      %2069 = vmatprep.subr.mxu0 0.0
      %2070 = vmatpush1.msra.mxu0 0.0
      %2071 = vmatprep.subr.mxu0 0.0
      %2072 = vmatpush1.msra.mxu0 0.0
      %2073 = vmatprep.subr.mxu0 0.0
      %2074 = vmatpush1.msra.mxu0 0.0
      %2075 = vmatprep.mubr.f32.mxu0 0.0
      %2076 = vmatmul.mubr.f32.gmra.mrb[0].mxu0 %v2006
      %v2077 = vpop.f32.mrb[0].mxu0
      %v2078 = vadd.f32 0.0, %v2077
      %v2079 = vpop.f32.mrb[0].mxu0
      %v2080 = vadd.f32 0.0, %v2079
      %2081 = vmatprep.mubr.f32.mxu0 0.0
      %2082 = vmatmul.mubr.f32.gmra.mrb[0].mxu0 %v2009
      %v2083 = vpop.f32.mrb[0].mxu0
      %v2084 = vadd.f32 0.0, %v2083
      %v2085 = vpop.f32.mrb[0].mxu0
      %v2086 = vadd.f32 0.0, %v2085
      %2087 = vdwg.mxu0
      %v2088 = vld [vmem:[%s6] sm:$0xff]
      %v2089 = vld [vmem:[%s6 + $0x8] sm:$0xff]
      %v2090 = vld [vmem:[%s6 + $0x10] sm:$0xff]
      %v2091 = vld [vmem:[%s6 + $0x18] sm:$0xff]
      %v2092 = vld [vmem:[%s6 + $0x20] sm:$0xff]
      %v2093 = vld [vmem:[%s6 + $0x28] sm:$0xff]
      %v2094 = vld [vmem:[%s6 + $0x30] sm:$0xff]
      %v2095 = vld [vmem:[%s6 + $0x38] sm:$0xff]
      %v2096 = vld [vmem:[%s6 + $0x40] sm:$0xff]
      %v2097 = vld [vmem:[%s6 + $0x48] sm:$0xff]
      %v2098 = vld [vmem:[%s6 + $0x50] sm:$0xff]
      %v2099 = vld [vmem:[%s6 + $0x58] sm:$0xff]
      %v2100 = vld [vmem:[%s6 + $0x60] sm:$0xff]
      %v2101 = vld [vmem:[%s6 + $0x68] sm:$0xff]
      %v2102 = vld [vmem:[%s6 + $0x70] sm:$0xff]
      %v2103 = vld [vmem:[%s6 + $0x78] sm:$0xff]
      %2104 = vmatprep.subr.mxu0 %v2089
      %2105 = vmatpush1.msra.mxu0 %v2088
      %2106 = vmatprep.subr.mxu0 %v2091
      %2107 = vmatpush1.msra.mxu0 %v2090
      %2108 = vmatprep.subr.mxu0 %v2093
      %2109 = vmatpush1.msra.mxu0 %v2092
      %2110 = vmatprep.subr.mxu0 %v2095
      %2111 = vmatpush1.msra.mxu0 %v2094
      %2112 = vmatprep.subr.mxu0 %v2097
      %2113 = vmatpush1.msra.mxu0 %v2096
      %2114 = vmatprep.subr.mxu0 %v2099
      %2115 = vmatpush1.msra.mxu0 %v2098
      %2116 = vmatprep.subr.mxu0 %v2101
      %2117 = vmatpush1.msra.mxu0 %v2100
      %2118 = vmatprep.subr.mxu0 %v2103
      %2119 = vmatpush1.msra.mxu0 %v2102
      %2120 = vmatprep.subr.mxu0 0.0
      %2121 = vmatpush1.msra.mxu0 0.0
      %2122 = vmatprep.subr.mxu0 0.0
      %2123 = vmatpush1.msra.mxu0 0.0
      %2124 = vmatprep.subr.mxu0 0.0
      %2125 = vmatpush1.msra.mxu0 0.0
      %2126 = vmatprep.subr.mxu0 0.0
      %2127 = vmatpush1.msra.mxu0 0.0
      %2128 = vmatprep.subr.mxu0 0.0
      %2129 = vmatpush1.msra.mxu0 0.0
      %2130 = vmatprep.subr.mxu0 0.0
      %2131 = vmatpush1.msra.mxu0 0.0
      %2132 = vmatprep.subr.mxu0 0.0
      %2133 = vmatpush1.msra.mxu0 0.0
      %2134 = vmatprep.subr.mxu0 0.0
      %2135 = vmatpush1.msra.mxu0 0.0
      %2136 = vmatprep.subr.mxu0 0.0
      %2137 = vmatpush1.msra.mxu0 0.0
      %2138 = vmatprep.subr.mxu0 0.0
      %2139 = vmatpush1.msra.mxu0 0.0
      %2140 = vmatprep.subr.mxu0 0.0
      %2141 = vmatpush1.msra.mxu0 0.0
      %2142 = vmatprep.subr.mxu0 0.0
      %2143 = vmatpush1.msra.mxu0 0.0
      %2144 = vmatprep.subr.mxu0 0.0
      %2145 = vmatpush1.msra.mxu0 0.0
      %2146 = vmatprep.subr.mxu0 0.0
      %2147 = vmatpush1.msra.mxu0 0.0
      %2148 = vmatprep.subr.mxu0 0.0
      %2149 = vmatpush1.msra.mxu0 0.0
      %2150 = vmatprep.subr.mxu0 0.0
      %2151 = vmatpush1.msra.mxu0 0.0
      %2152 = vmatprep.subr.mxu0 0.0
      %2153 = vmatpush1.msra.mxu0 0.0
      %2154 = vmatprep.subr.mxu0 0.0
      %2155 = vmatpush1.msra.mxu0 0.0
      %2156 = vmatprep.subr.mxu0 0.0
      %2157 = vmatpush1.msra.mxu0 0.0
      %2158 = vmatprep.subr.mxu0 0.0
      %2159 = vmatpush1.msra.mxu0 0.0
      %2160 = vmatprep.subr.mxu0 0.0
      %2161 = vmatpush1.msra.mxu0 0.0
      %2162 = vmatprep.subr.mxu0 0.0
      %2163 = vmatpush1.msra.mxu0 0.0
      %2164 = vmatprep.subr.mxu0 0.0
      %2165 = vmatpush1.msra.mxu0 0.0
      %2166 = vmatprep.subr.mxu0 0.0
      %2167 = vmatpush1.msra.mxu0 0.0
      %2168 = vmatprep.mubr.f32.mxu0 0.0
      %2169 = vmatmul.mubr.f32.gmra.mrb[0].mxu0 %v2006
      %v2170 = vpop.f32.mrb[0].mxu0
      %v2171 = vadd.f32 0.0, %v2170
      %v2172 = vpop.f32.mrb[0].mxu0
      %v2173 = vadd.f32 0.0, %v2172
      %2174 = vmatprep.mubr.f32.mxu0 0.0
      %2175 = vmatmul.mubr.f32.gmra.mrb[0].mxu0 %v2009
      %v2176 = vpop.f32.mrb[0].mxu0
      %v2177 = vadd.f32 0.0, %v2176
      %v2178 = vpop.f32.mrb[0].mxu0
      %v2179 = vadd.f32 0.0, %v2178
      %2180 = vdwg.mxu0
      %v2181 = vxor.u32 %v2078, 2147483648
      %v2182 = vxor.u32 %v2080, 2147483648
      %v2183 = vxor.u32 %v2084, 2147483648
      %v2184 = vxor.u32 %v2086, 2147483648
      %v2185 = vmul.f32 %v2181, 1.442695
      %v2186 = vpow.pop %v2185
      %v2187 = vmul.f32 %v2182, 1.442695
      %v2188 = vpow.pop %v2187
      %v2189 = vmul.f32 %v2183, 1.442695
      %v2190 = vpow.pop %v2189
      %v2191 = vmul.f32 %v2184, 1.442695
      %v2192 = vpow.pop %v2191
      %v2193 = vadd.f32 %v2186, 1.0
      %v2194 = vadd.f32 %v2188, 1.0
      %v2195 = vadd.f32 %v2190, 1.0
      %v2196 = vadd.f32 %v2192, 1.0
      %v2197 = vrcp.pop %v2193
      %v2198 = vmul.f32 1.0, %v2197
      %v2199 = vrcp.pop %v2194
      %v2200 = vmul.f32 1.0, %v2199
      %v2201 = vrcp.pop %v2195
      %v2202 = vmul.f32 1.0, %v2201
      %v2203 = vrcp.pop %v2196
      %v2204 = vmul.f32 1.0, %v2203
      %v2205 = vmul.f32 %v2078, %v2198
      %v2206 = vmul.f32 %v2080, %v2200
      %v2207 = vmul.f32 %v2084, %v2202
      %v2208 = vmul.f32 %v2086, %v2204
      %v2209 = vmul.f32 %v2205, %v2171
      %v2210 = vmul.f32 %v2206, %v2173
      %v2211 = vmul.f32 %v2207, %v2177
      %v2212 = vmul.f32 %v2208, %v2179
      %v2213 = vld [vmem:[%s7] sm:$0xff]
      %v2214 = vld [vmem:[%s7 + $0x8] sm:$0xff]
      %v2215 = vld [vmem:[%s7 + $0x10] sm:$0xff]
      %v2216 = vld [vmem:[%s7 + $0x18] sm:$0xff]
      %v2217 = vld [vmem:[%s7 + $0x20] sm:$0xff]
      %v2218 = vld [vmem:[%s7 + $0x28] sm:$0xff]
      %v2219 = vld [vmem:[%s7 + $0x30] sm:$0xff]
      %v2220 = vld [vmem:[%s7 + $0x38] sm:$0xff]
      %v2221 = vld [vmem:[%s7 + $0x40] sm:$0xff]
      %v2222 = vld [vmem:[%s7 + $0x48] sm:$0xff]
      %v2223 = vld [vmem:[%s7 + $0x50] sm:$0xff]
      %v2224 = vld [vmem:[%s7 + $0x58] sm:$0xff]
      %v2225 = vld [vmem:[%s7 + $0x60] sm:$0xff]
      %v2226 = vld [vmem:[%s7 + $0x68] sm:$0xff]
      %v2227 = vld [vmem:[%s7 + $0x70] sm:$0xff]
      %v2228 = vld [vmem:[%s7 + $0x78] sm:$0xff]
      %v2229 = vld [vmem:[%s7 + $0x80] sm:$0xff]
      %v2230 = vld [vmem:[%s7 + $0x88] sm:$0xff]
      %v2231 = vld [vmem:[%s7 + $0x90] sm:$0xff]
      %v2232 = vld [vmem:[%s7 + $0x98] sm:$0xff]
      %v2233 = vld [vmem:[%s7 + $0xa0] sm:$0xff]
      %v2234 = vld [vmem:[%s7 + $0xa8] sm:$0xff]
      %v2235 = vld [vmem:[%s7 + $0xb0] sm:$0xff]
      %v2236 = vld [vmem:[%s7 + $0xb8] sm:$0xff]
      %v2237 = vld [vmem:[%s7 + $0xc0] sm:$0xff]
      %v2238 = vld [vmem:[%s7 + $0xc8] sm:$0xff]
      %v2239 = vld [vmem:[%s7 + $0xd0] sm:$0xff]
      %v2240 = vld [vmem:[%s7 + $0xd8] sm:$0xff]
      %v2241 = vld [vmem:[%s7 + $0xe0] sm:$0xff]
      %v2242 = vld [vmem:[%s7 + $0xe8] sm:$0xff]
      %v2243 = vld [vmem:[%s7 + $0xf0] sm:$0xff]
      %v2244 = vld [vmem:[%s7 + $0xf8] sm:$0xff]
      %2245 = vmatprep.subr.mxu0 0.0
      %2246 = vmatpush1.msra.mxu0 %v2213
      %2247 = vmatprep.subr.mxu0 0.0
      %2248 = vmatpush1.msra.mxu0 %v2214
      %2249 = vmatprep.subr.mxu0 0.0
      %2250 = vmatpush1.msra.mxu0 %v2215
      %2251 = vmatprep.subr.mxu0 0.0
      %2252 = vmatpush1.msra.mxu0 %v2216
      %2253 = vmatprep.subr.mxu0 0.0
      %2254 = vmatpush1.msra.mxu0 %v2217
      %2255 = vmatprep.subr.mxu0 0.0
      %2256 = vmatpush1.msra.mxu0 %v2218
      %2257 = vmatprep.subr.mxu0 0.0
      %2258 = vmatpush1.msra.mxu0 %v2219
      %2259 = vmatprep.subr.mxu0 0.0
      %2260 = vmatpush1.msra.mxu0 %v2220
      %2261 = vmatprep.subr.mxu0 0.0
      %2262 = vmatpush1.msra.mxu0 %v2221
      %2263 = vmatprep.subr.mxu0 0.0
      %2264 = vmatpush1.msra.mxu0 %v2222
      %2265 = vmatprep.subr.mxu0 0.0
      %2266 = vmatpush1.msra.mxu0 %v2223
      %2267 = vmatprep.subr.mxu0 0.0
      %2268 = vmatpush1.msra.mxu0 %v2224
      %2269 = vmatprep.subr.mxu0 0.0
      %2270 = vmatpush1.msra.mxu0 %v2225
      %2271 = vmatprep.subr.mxu0 0.0
      %2272 = vmatpush1.msra.mxu0 %v2226
      %2273 = vmatprep.subr.mxu0 0.0
      %2274 = vmatpush1.msra.mxu0 %v2227
      %2275 = vmatprep.subr.mxu0 0.0
      %2276 = vmatpush1.msra.mxu0 %v2228
      %2277 = vmatprep.subr.mxu0 0.0
      %2278 = vmatpush1.msra.mxu0 %v2229
      %2279 = vmatprep.subr.mxu0 0.0
      %2280 = vmatpush1.msra.mxu0 %v2230
      %2281 = vmatprep.subr.mxu0 0.0
      %2282 = vmatpush1.msra.mxu0 %v2231
      %2283 = vmatprep.subr.mxu0 0.0
      %2284 = vmatpush1.msra.mxu0 %v2232
      %2285 = vmatprep.subr.mxu0 0.0
      %2286 = vmatpush1.msra.mxu0 %v2233
      %2287 = vmatprep.subr.mxu0 0.0
      %2288 = vmatpush1.msra.mxu0 %v2234
      %2289 = vmatprep.subr.mxu0 0.0
      %2290 = vmatpush1.msra.mxu0 %v2235
      %2291 = vmatprep.subr.mxu0 0.0
      %2292 = vmatpush1.msra.mxu0 %v2236
      %2293 = vmatprep.subr.mxu0 0.0
      %2294 = vmatpush1.msra.mxu0 %v2237
      %2295 = vmatprep.subr.mxu0 0.0
      %2296 = vmatpush1.msra.mxu0 %v2238
      %2297 = vmatprep.subr.mxu0 0.0
      %2298 = vmatpush1.msra.mxu0 %v2239
      %2299 = vmatprep.subr.mxu0 0.0
      %2300 = vmatpush1.msra.mxu0 %v2240
      %2301 = vmatprep.subr.mxu0 0.0
      %2302 = vmatpush1.msra.mxu0 %v2241
      %2303 = vmatprep.subr.mxu0 0.0
      %2304 = vmatpush1.msra.mxu0 %v2242
      %2305 = vmatprep.subr.mxu0 0.0
      %2306 = vmatpush1.msra.mxu0 %v2243
      %2307 = vmatprep.subr.mxu0 0.0
      %2308 = vmatpush1.msra.mxu0 %v2244
      %2309 = vmatprep.mubr.f32.mxu0 %v2210
      %2310 = vmatmul.mubr.f32.gmra.mrb[0].mxu0 %v2209
      %v2311 = vpop.f32.mrb[0].mxu0
      %v2312 = vadd.f32 0.0, %v2311
      %v2313 = vpop.f32.mrb[0].mxu0
      %2314 = vmatprep.mubr.f32.mxu0 %v2212
      %2315 = vmatmul.mubr.f32.gmra.mrb[0].mxu0 %v2211
      %v2316 = vpop.f32.mrb[0].mxu0
      %v2317 = vadd.f32 0.0, %v2316
      %v2318 = vpop.f32.mrb[0].mxu0
      %2319 = vdwg.mxu0
      %v2320 = vadd.f32 %v1962, %v2312
      %v2321 = vadd.f32 %v1963, %v2317
      %2322 = vst.msk [vmem:[%s359] sm:$0xff] %vm364, %v2320
      %2323 = vst.msk [vmem:[%s359 + $0x8] sm:$0xff] %vm364, %v2321
      %p2324 = scmp.lt.s32.totalorder %s21, 1
      %s2325 = scalar_select %p2324, %s21, 1
      %s2326 = smul.addr %s2325, 2
      %s2327 = smul.addr %s2326, 8
      %s2328 = scalar_lea.vmem %s10, %s2327
      // Predicated region
      $region61: #{transformer_forward.3} parent=59 // pred_check
        %p2329 = pneg %p254
      $region62: #{transformer_forward.3} parent=59 // pred_check_branch
        %2331 = sbr.rel (%p2329) target = $region64
      $region63: #{transformer_forward.3} parent=59 // pred_region
        _
      $region64: #{transformer_forward.3} parent=59 // pred_fallthru
        _
    $region60: #{transformer_forward.3} parent=5 // pred_fallthru
      _
    %p2332 = scmp.le.s32.totalorder 2, %s16
    // Predicated region
    $region65: #{transformer_forward.3} parent=5 // pred_check
      %p2333 = pneg %p2332
    $region66: #{transformer_forward.3} parent=5 // pred_check_branch
      %2335 = sbr.rel (%p2333) target = $region68
    $region67: #{transformer_forward.3} parent=5 // pred_region
      %s2336 = ssub.s32 %s16, 2
      // Predicated region
      $region69: #{transformer_forward.3} parent=67 // pred_check
        %p2337 = pneg %p260
      $region70: #{transformer_forward.3} parent=67 // pred_check_branch
        %2339 = sbr.rel (%p2337) target = $region72
      $region71: #{transformer_forward.3} parent=67 // pred_region
        %p2340 = scmp.lt.s32.totalorder %s22, 1
        %s2341 = scalar_select %p2340, %s22, 1
        %s2342 = smul.addr %s2341, 2
        %s2343 = smul.addr %s2342, 8
        %s2344 = scalar_lea.vmem %s10, %s2343
      $region72: #{transformer_forward.3} parent=67 // pred_fallthru
        _
    $region68: #{transformer_forward.3} parent=5 // pred_fallthru
      _
  $region6: #{transformer_forward.3} parent=0 // loop_footer
    %s20 = sadd.s32 1, %s16
  $region7: #{transformer_forward.3} parent=0 // loop_footer_branch
    %15 = sbr.rel target = $region3
  $region8: #{transformer_forward.3} parent=0 // loop_exit
    _

</llo_original>
